<compile_context>
chip_gen: v7x
topology: tpu7x:2x2x1
jax: 0.10.0
libtpu: 0.0.40
codegen_flags: <defaults>
</compile_context>

<pallas_src>
import functools
import math

import jax
import jax.numpy as jnp
from jax.experimental import pallas as pl
from jax.experimental.pallas import tpu as pltpu

# ---- small synthetic BERT config (bert-base is 768/12/12/3072; scaled down) ----
VOCAB = 50
TYPE_VOCAB = 2
MAX_POS = 16
HIDDEN = 32
NUM_HEADS = 2
HEAD_DIM = HIDDEN // NUM_HEADS
INTERMEDIATE = 64
NUM_LAYERS = 2
LN_EPS = 1e-12
NEG_INF = -1e9


# ----------------------------- kernel helpers -----------------------------
def _layer_norm(x, g, b, eps):
    mu = jnp.mean(x, axis=-1, keepdims=True)
    var = jnp.mean(jnp.square(x - mu), axis=-1, keepdims=True)
    return (x - mu) * jax.lax.rsqrt(var + eps) * g + b


# ----------------------------- fused encoder kernel -----------------------------
def _encoder_kernel(*refs, num_heads, head_dim, batch, seq, eps, with_loss):
    if with_loss:
        (emb_ref, mask_ref, eln_g_ref, eln_b_ref,
         wqkv_ref, bqkv_ref, wo_ref, bo_ref, ln1_g_ref, ln1_b_ref,
         w1_ref, b1_ref, w2_ref, b2_ref, ln2_g_ref, ln2_b_ref,
         rw_ref, rb_ref, lab_ref,
         logits_ref, loss_ref, h_ref, ctx_ref) = refs
    else:
        (emb_ref, mask_ref, eln_g_ref, eln_b_ref,
         wqkv_ref, bqkv_ref, wo_ref, bo_ref, ln1_g_ref, ln1_b_ref,
         w1_ref, b1_ref, w2_ref, b2_ref, ln2_g_ref, ln2_b_ref,
         rw_ref, rb_ref,
         logits_ref, h_ref, ctx_ref) = refs
        lab_ref = loss_ref = None

    layer = pl.program_id(0)
    n_layers = pl.num_programs(0)
    hidden = num_heads * head_dim
    scale = 1.0 / math.sqrt(head_dim)

    # --- embedding LayerNorm, fused into the first layer step ---
    @pl.when(layer == 0)
    def _():
        h_ref[...] = _layer_norm(emb_ref[...], eln_g_ref[...], eln_b_ref[...], eps)

    h = h_ref[...]                       # (B*S, H) f32, resident in VMEM scratch
    add_mask = mask_ref[...]             # (B*S, B*S) block-diagonal additive mask

    # --- fused QKV projection: one MXU pass, bf16 operands, f32 accumulate ---
    qkv = jnp.dot(h.astype(jnp.bfloat16), wqkv_ref[...].astype(jnp.bfloat16),
                  preferred_element_type=jnp.float32) + bqkv_ref[...]   # (T, 3H)
    q = qkv[:, 0:hidden]
    k = qkv[:, hidden:2 * hidden]
    v = qkv[:, 2 * hidden:3 * hidden]

    # --- attention over the whole batch slab; heads are static lane slices.
    # Per-head contexts are written into lane slices of one (T, H) buffer so the
    # output projection is a single (T,H)@(H,H) dot.
    for hh in range(num_heads):
        sl = slice(hh * head_dim, (hh + 1) * head_dim)
        s = jnp.einsum("qd,kd->qk",
                       q[:, sl].astype(jnp.bfloat16),
                       k[:, sl].astype(jnp.bfloat16),
                       preferred_element_type=jnp.float32) * scale + add_mask
        s = s - jnp.max(s, axis=-1, keepdims=True)
        p = jnp.exp(s)
        p = p / jnp.sum(p, axis=-1, keepdims=True)          # exact divide (f32)
        ctx_ref[:, sl] = jnp.dot(p.astype(jnp.bfloat16),
                                 v[:, sl].astype(jnp.bfloat16),
                                 preferred_element_type=jnp.float32)

    attn_out = jnp.dot(ctx_ref[...].astype(jnp.bfloat16),
                       wo_ref[...].astype(jnp.bfloat16),
                       preferred_element_type=jnp.float32) + bo_ref[...]
    h1 = _layer_norm(attn_out + h, ln1_g_ref[...], ln1_b_ref[...], eps)

    # --- FFN ---
    inter = jnp.dot(h1.astype(jnp.bfloat16), w1_ref[...].astype(jnp.bfloat16),
                    preferred_element_type=jnp.float32) + b1_ref[...]
    # TODO(synk): HF BERT uses exact erf-GELU; tanh-approx GELU used for Mosaic-safe lowering.
    inter = jax.nn.gelu(inter, approximate=True)
    ffn_out = jnp.dot(inter.astype(jnp.bfloat16), w2_ref[...].astype(jnp.bfloat16),
                      preferred_element_type=jnp.float32) + b2_ref[...]
    h_ref[...] = _layer_norm(ffn_out + h1, ln2_g_ref[...], ln2_b_ref[...], eps)

    # --- regression head (+ optional MSE), fused into the last layer step ---
    @pl.when(layer == n_layers - 1)
    def _():
        cls = h_ref[pl.ds(0, batch, stride=seq), :]          # (B, H) CLS rows
        p = jnp.dot(cls.astype(jnp.bfloat16), rw_ref[...].astype(jnp.bfloat16),
                    preferred_element_type=jnp.float32) + rb_ref[...]   # (B, 1)
        logits_ref[...] = p.astype(logits_ref.dtype)
        if with_loss:
            d = p - lab_ref[...]
            loss_ref[...] = (jnp.sum(d * d, axis=0, keepdims=True)
                             * (1.0 / batch)).astype(loss_ref.dtype)


def bert_encoder_regressor(params, emb, add_mask, batch, seq, labels=None):
    tokens, hid = emb.shape
    inter = params["w1"].shape[-1]
    with_loss = labels is not None

    def rep(arr):  # small array, same block every layer step
        nd = arr.ndim
        return pl.BlockSpec(arr.shape, lambda l, nd=nd: (0,) * nd)

    def per_layer(arr):  # (L, a, b) stacked weight -> this layer's (a, b) block
        return pl.BlockSpec((None,) + arr.shape[1:], lambda l: (l, 0, 0))

    stacked_names = ["wqkv", "bqkv", "wo", "bo", "attn_ln_g", "attn_ln_b",
                     "w1", "b1", "w2", "b2", "ffn_ln_g", "ffn_ln_b"]
    stacked = [params[k] for k in stacked_names]

    inputs = [emb, add_mask, params["emb_ln_g"], params["emb_ln_b"], *stacked,
              params["reg_w"], params["reg_b"]]
    in_specs = ([rep(emb), rep(add_mask), rep(params["emb_ln_g"]),
                 rep(params["emb_ln_b"])]
                + [per_layer(w) for w in stacked]
                + [rep(params["reg_w"]), rep(params["reg_b"])])

    if with_loss:
        lab = labels.reshape(batch, 1).astype(jnp.float32)
        inputs.append(lab)
        in_specs.append(rep(lab))
        out_shape = (jax.ShapeDtypeStruct((batch, 1), jnp.float32),
                     jax.ShapeDtypeStruct((1, 1), jnp.float32))
        out_specs = (pl.BlockSpec((batch, 1), lambda l: (0, 0)),
                     pl.BlockSpec((1, 1), lambda l: (0, 0)))
    else:
        out_shape = jax.ShapeDtypeStruct((batch, 1), jnp.float32)
        out_specs = pl.BlockSpec((batch, 1), lambda l: (0, 0))

    flops = NUM_LAYERS * (2 * tokens * hid * 3 * hid        # QKV
                          + 4 * tokens * tokens * hid       # scores + ctx
                          + 2 * tokens * hid * hid          # out proj
                          + 4 * tokens * hid * inter)       # FFN1 + FFN2
    flops += 2 * batch * hid                                 # regressor
    transcendentals = NUM_LAYERS * (NUM_HEADS * tokens * tokens   # exp
                                    + tokens * inter              # gelu tanh
                                    + 2 * tokens)                 # LN rsqrt
    bytes_accessed = (sum(int(x.size) * 4 for x in inputs)
                      + (batch + 1) * 4)

    out = pl.pallas_call(
        functools.partial(_encoder_kernel, num_heads=NUM_HEADS, head_dim=HEAD_DIM,
                          batch=batch, seq=seq, eps=LN_EPS, with_loss=with_loss),
        out_shape=out_shape,
        grid=(NUM_LAYERS,),
        in_specs=in_specs,
        out_specs=out_specs,
        scratch_shapes=[pltpu.VMEM((tokens, hid), jnp.float32),   # resident hidden states
                        pltpu.VMEM((tokens, hid), jnp.float32)],  # per-layer attn context
        compiler_params=pltpu.CompilerParams(dimension_semantics=("arbitrary",)),
        cost_estimate=pl.CostEstimate(flops=flops,
                                      transcendentals=transcendentals,
                                      bytes_accessed=bytes_accessed),
    )(*inputs)

    if with_loss:
        logits, loss = out
        return logits[:, 0], loss[0, 0]
    return out[:, 0], None


# ----------------------------- parameters -----------------------------
def init_params(key):
    def normal(k, shape):
        return 0.02 * jax.random.normal(k, shape, dtype=jnp.float32)

    keys = jax.random.split(key, 8)
    L, H, I = NUM_LAYERS, HIDDEN, INTERMEDIATE
    return {
        "word_emb": normal(keys[0], (VOCAB, H)),
        "pos_emb": normal(keys[1], (MAX_POS, H)),
        "type_emb": normal(keys[2], (TYPE_VOCAB, H)),
        "emb_ln_g": jnp.ones((1, H), jnp.float32),
        "emb_ln_b": jnp.zeros((1, H), jnp.float32),
        "reg_w": normal(keys[3], (H, 1)),
        "reg_b": jnp.zeros((1, 1), jnp.float32),
        # per-layer weights stacked along a leading layer axis; f32 storage
        # (checkpoint-compatible), cast to bf16 only at MXU inputs in-kernel.
        "wqkv": normal(keys[4], (L, H, 3 * H)),
        "bqkv": jnp.zeros((L, 1, 3 * H), jnp.float32),
        "wo": normal(keys[5], (L, H, H)),
        "bo": jnp.zeros((L, 1, H), jnp.float32),
        "attn_ln_g": jnp.ones((L, 1, H), jnp.float32),
        "attn_ln_b": jnp.zeros((L, 1, H), jnp.float32),
        "w1": normal(keys[6], (L, H, I)),
        "b1": jnp.zeros((L, 1, I), jnp.float32),
        "w2": normal(keys[7], (L, I, H)),
        "b2": jnp.zeros((L, 1, H), jnp.float32),
        "ffn_ln_g": jnp.ones((L, 1, H), jnp.float32),
        "ffn_ln_b": jnp.zeros((L, 1, H), jnp.float32),
    }


# ----------------------------- forward pass -----------------------------
def bert_regression_forward(params, input_ids, attention_mask=None,
                            token_type_ids=None, labels=None):
    B, S = input_ids.shape
    if attention_mask is None:
        attention_mask = jnp.ones((B, S), jnp.float32)
    if token_type_ids is None:
        token_type_ids = jnp.zeros((B, S), jnp.int32)

    # TODO(synk): word/pos/type embedding gathers are data-dependent and kept in
    # XLA glue (tables are a few KB; the rest of the model is one pallas_call).
    emb = (jnp.take(params["word_emb"], input_ids, axis=0)
           + params["pos_emb"][None, :S, :]
           + jnp.take(params["type_emb"], token_type_ids, axis=0))
    emb = emb.reshape(B * S, HIDDEN).astype(jnp.float32)

    # Block-diagonal additive mask over the flattened (B*S) token axis:
    # attend only within the same sequence and only to non-padded keys
    # (standard BERT extended-attention-mask semantics).
    batch_ids = jnp.repeat(jnp.arange(B), S)
    same_seq = batch_ids[:, None] == batch_ids[None, :]
    key_ok = (attention_mask.reshape(B * S).astype(jnp.float32) > 0)[None, :]
    add_mask = jnp.where(same_seq & key_ok, 0.0, NEG_INF).astype(jnp.float32)

    prediction, loss = bert_encoder_regressor(params, emb, add_mask, B, S, labels)
    return {"loss": loss, "logits": prediction}


# ----------------------------- driver -----------------------------
if __name__ == "__main__":
    key = jax.random.PRNGKey(0)
    pkey, ikey, lkey = jax.random.split(key, 3)
    params = init_params(pkey)

    B, S = 2, 8
    input_ids = jax.random.randint(ikey, (B, S), 0, VOCAB, dtype=jnp.int32)
    attention_mask = jnp.ones((B, S), jnp.float32)
    token_type_ids = jnp.zeros((B, S), jnp.int32)
    labels = jax.random.uniform(lkey, (B,), jnp.float32, 1.0, 5.0)

    out = bert_regression_forward(params, input_ids, attention_mask,
                                  token_type_ids, labels)
    jax.block_until_ready((out["loss"], out["logits"]))
    assert out["logits"].shape == (B,)
    assert out["loss"].shape == ()
    print("KERNEL_OK")
</pallas_src>

<mosaic_0001>
module attributes {stable_mosaic.version = 11 : i64} {
  func.func @_encoder_kernel(%arg0: i32, %arg1: memref<16x32xf32, #tpu.memory_space<vmem>>, %arg2: memref<16x16xf32, #tpu.memory_space<vmem>>, %arg3: memref<1x32xf32, #tpu.memory_space<vmem>>, %arg4: memref<1x32xf32, #tpu.memory_space<vmem>>, %arg5: memref<1x32x96xf32, #tpu.memory_space<vmem>>, %arg6: memref<1x1x96xf32, #tpu.memory_space<vmem>>, %arg7: memref<1x32x32xf32, #tpu.memory_space<vmem>>, %arg8: memref<1x1x32xf32, #tpu.memory_space<vmem>>, %arg9: memref<1x1x32xf32, #tpu.memory_space<vmem>>, %arg10: memref<1x1x32xf32, #tpu.memory_space<vmem>>, %arg11: memref<1x32x64xf32, #tpu.memory_space<vmem>>, %arg12: memref<1x1x64xf32, #tpu.memory_space<vmem>>, %arg13: memref<1x64x32xf32, #tpu.memory_space<vmem>>, %arg14: memref<1x1x32xf32, #tpu.memory_space<vmem>>, %arg15: memref<1x1x32xf32, #tpu.memory_space<vmem>>, %arg16: memref<1x1x32xf32, #tpu.memory_space<vmem>>, %arg17: memref<32x1xf32, #tpu.memory_space<vmem>>, %arg18: memref<1x1xf32, #tpu.memory_space<vmem>>, %arg19: memref<2x1xf32, #tpu.memory_space<vmem>>, %arg20: memref<2x1xf32, #tpu.memory_space<vmem>>, %arg21: memref<1x1xf32, #tpu.memory_space<vmem>>, %arg22: memref<16x32xf32, #tpu.memory_space<vmem>>, %arg23: memref<16x32xf32, #tpu.memory_space<vmem>>) attributes {dimension_semantics = [#tpu.dimension_semantics<arbitrary>], iteration_bounds = array<i64: 2>, scalar_prefetch = 0 : i64, scratch_operands = 2 : i64, tpu.core_type = #tpu.core_type<tc>, window_params = [{pipeline_mode = #tpu.pipeline_mode<synchronous>, transform_indices = @transform_0, window_bounds = array<i64: 16, 32>}, {pipeline_mode = #tpu.pipeline_mode<synchronous>, transform_indices = @transform_1, window_bounds = array<i64: 16, 16>}, {pipeline_mode = #tpu.pipeline_mode<synchronous>, transform_indices = @transform_2, window_bounds = array<i64: 1, 32>}, {pipeline_mode = #tpu.pipeline_mode<synchronous>, transform_indices = @transform_3, window_bounds = array<i64: 1, 32>}, {transform_indices = @transform_4, window_bounds = array<i64: 1, 32, 96>}, {transform_indices = @transform_5, window_bounds = array<i64: 1, 1, 96>}, {transform_indices = @transform_6, window_bounds = array<i64: 1, 32, 32>}, {transform_indices = @transform_7, window_bounds = array<i64: 1, 1, 32>}, {transform_indices = @transform_8, window_bounds = array<i64: 1, 1, 32>}, {transform_indices = @transform_9, window_bounds = array<i64: 1, 1, 32>}, {transform_indices = @transform_10, window_bounds = array<i64: 1, 32, 64>}, {transform_indices = @transform_11, window_bounds = array<i64: 1, 1, 64>}, {transform_indices = @transform_12, window_bounds = array<i64: 1, 64, 32>}, {transform_indices = @transform_13, window_bounds = array<i64: 1, 1, 32>}, {transform_indices = @transform_14, window_bounds = array<i64: 1, 1, 32>}, {transform_indices = @transform_15, window_bounds = array<i64: 1, 1, 32>}, {pipeline_mode = #tpu.pipeline_mode<synchronous>, transform_indices = @transform_16, window_bounds = array<i64: 32, 1>}, {pipeline_mode = #tpu.pipeline_mode<synchronous>, transform_indices = @transform_17, window_bounds = array<i64: 1, 1>}, {pipeline_mode = #tpu.pipeline_mode<synchronous>, transform_indices = @transform_18, window_bounds = array<i64: 2, 1>}, {pipeline_mode = #tpu.pipeline_mode<synchronous>, transform_indices = @transform_19, window_bounds = array<i64: 2, 1>}, {pipeline_mode = #tpu.pipeline_mode<synchronous>, transform_indices = @transform_20, window_bounds = array<i64: 1, 1>}]} {
    %c0_i32 = arith.constant 0 : i32
    %0 = arith.cmpi eq, %arg0, %c0_i32 : i32
    %1 = arith.extui %0 : i1 to i32
    %c0_i32_0 = arith.constant 0 : i32
    %2 = arith.cmpi ne, %1, %c0_i32_0 : i32
    scf.if %2 {
      %c0_75 = arith.constant 0 : index
      %c0_76 = arith.constant 0 : index
      %160 = vector.load %arg1[%c0_75, %c0_76] : memref<16x32xf32, #tpu.memory_space<vmem>>, vector<16x32xf32>
      %c0_77 = arith.constant 0 : index
      %c0_78 = arith.constant 0 : index
      %161 = vector.load %arg3[%c0_77, %c0_78] : memref<1x32xf32, #tpu.memory_space<vmem>>, vector<1x32xf32>
      %c0_79 = arith.constant 0 : index
      %c0_80 = arith.constant 0 : index
      %162 = vector.load %arg4[%c0_79, %c0_80] : memref<1x32xf32, #tpu.memory_space<vmem>>, vector<1x32xf32>
      %cst_81 = arith.constant dense<0.000000e+00> : vector<16xf32>
      %163 = vector.multi_reduction <add>, %160, %cst_81 [1] : vector<16x32xf32> to vector<16xf32>
      %164 = vector.shape_cast %163 : vector<16xf32> to vector<16x1xf32>
      %cst_82 = arith.constant 3.200000e+01 : f32
      %165 = vector.broadcast %cst_82 : f32 to vector<16x1xf32>
      %166 = arith.divf %164, %165 : vector<16x1xf32>
      %167 = vector.broadcast %166 : vector<16x1xf32> to vector<16x32xf32>
      %168 = arith.subf %160, %167 : vector<16x32xf32>
      %169 = arith.mulf %168, %168 : vector<16x32xf32>
      %cst_83 = arith.constant dense<0.000000e+00> : vector<16xf32>
      %170 = vector.multi_reduction <add>, %169, %cst_83 [1] : vector<16x32xf32> to vector<16xf32>
      %171 = vector.shape_cast %170 : vector<16xf32> to vector<16x1xf32>
      %cst_84 = arith.constant 3.200000e+01 : f32
      %172 = vector.broadcast %cst_84 : f32 to vector<16x1xf32>
      %173 = arith.divf %171, %172 : vector<16x1xf32>
      %174 = vector.broadcast %166 : vector<16x1xf32> to vector<16x32xf32>
      %175 = arith.subf %160, %174 : vector<16x32xf32>
      %cst_85 = arith.constant 9.99999996E-13 : f32
      %176 = vector.broadcast %cst_85 : f32 to vector<16x1xf32>
      %177 = arith.addf %173, %176 : vector<16x1xf32>
      %178 = math.rsqrt %177 : vector<16x1xf32>
      %179 = vector.broadcast %178 : vector<16x1xf32> to vector<16x32xf32>
      %180 = arith.mulf %175, %179 : vector<16x32xf32>
      %181 = vector.broadcast %161 : vector<1x32xf32> to vector<16x32xf32>
      %182 = arith.mulf %180, %181 : vector<16x32xf32>
      %183 = vector.broadcast %162 : vector<1x32xf32> to vector<16x32xf32>
      %184 = arith.addf %182, %183 : vector<16x32xf32>
      %c0_86 = arith.constant 0 : index
      %c0_87 = arith.constant 0 : index
      %185 = vector.load %arg22[%c0_86, %c0_87] : memref<16x32xf32, #tpu.memory_space<vmem>>, vector<16x32xf32>
      tpu.vector_store %arg22[%c0_86, %c0_87], %184 {strides = array<i32>} : memref<16x32xf32, #tpu.memory_space<vmem>>, vector<16x32xf32>,
    } else {
    }
    %c0 = arith.constant 0 : index
    %c0_1 = arith.constant 0 : index
    %3 = vector.load %arg22[%c0, %c0_1] : memref<16x32xf32, #tpu.memory_space<vmem>>, vector<16x32xf32>
    %c0_2 = arith.constant 0 : index
    %c0_3 = arith.constant 0 : index
    %4 = vector.load %arg2[%c0_2, %c0_3] : memref<16x16xf32, #tpu.memory_space<vmem>>, vector<16x16xf32>
    %5 = arith.truncf %3 : vector<16x32xf32> to vector<16x32xbf16>
    %c0_4 = arith.constant 0 : index
    %c0_5 = arith.constant 0 : index
    %c0_6 = arith.constant 0 : index
    %6 = vector.load %arg5[%c0_4, %c0_5, %c0_6] : memref<1x32x96xf32, #tpu.memory_space<vmem>>, vector<1x32x96xf32>
    %7 = vector.shape_cast %6 : vector<1x32x96xf32> to vector<32x96xf32>
    %8 = arith.truncf %7 : vector<32x96xf32> to vector<32x96xbf16>
    %cst = arith.constant dense<0.000000e+00> : vector<16x96xf32>
    %9 = tpu.matmul %5, %8, %cst {dimension_numbers = #tpu.dot_dimension_numbers<[1], [0], [0], [1], [0, 0, 1, 1], [], []>} : vector<16x32xbf16>, vector<32x96xbf16>, vector<16x96xf32> -> vector<16x96xf32>
    %c0_7 = arith.constant 0 : index
    %c0_8 = arith.constant 0 : index
    %c0_9 = arith.constant 0 : index
    %10 = vector.load %arg6[%c0_7, %c0_8, %c0_9] : memref<1x1x96xf32, #tpu.memory_space<vmem>>, vector<1x1x96xf32>
    %11 = vector.shape_cast %10 : vector<1x1x96xf32> to vector<1x96xf32>
    %12 = vector.broadcast %11 : vector<1x96xf32> to vector<16x96xf32>
    %13 = arith.addf %9, %12 : vector<16x96xf32>
    %14 = vector.extract_strided_slice %13 {offsets = [0, 0], sizes = [16, 32], strides = [1, 1]} : vector<16x96xf32> to vector<16x32xf32>
    %15 = vector.extract_strided_slice %13 {offsets = [0, 32], sizes = [16, 32], strides = [1, 1]} : vector<16x96xf32> to vector<16x32xf32>
    %16 = vector.extract_strided_slice %13 {offsets = [0, 64], sizes = [16, 32], strides = [1, 1]} : vector<16x96xf32> to vector<16x32xf32>
    %17 = vector.extract_strided_slice %14 {offsets = [0, 0], sizes = [16, 16], strides = [1, 1]} : vector<16x32xf32> to vector<16x16xf32>
    %18 = arith.truncf %17 : vector<16x16xf32> to vector<16x16xbf16>
    %19 = vector.extract_strided_slice %15 {offsets = [0, 0], sizes = [16, 16], strides = [1, 1]} : vector<16x32xf32> to vector<16x16xf32>
    %20 = arith.truncf %19 : vector<16x16xf32> to vector<16x16xbf16>
    "tpu.trace_start"() <{level = 10 : i32, message = "qd,kd->qk"}> : () -> ()
    %cst_10 = arith.constant dense<0.000000e+00> : vector<16x16xf32>
    %21 = tpu.matmul %18, %20, %cst_10 {dimension_numbers = #tpu.dot_dimension_numbers<[1], [1], [0], [0], [0, 0, 1, 0], [], []>} : vector<16x16xbf16>, vector<16x16xbf16>, vector<16x16xf32> -> vector<16x16xf32>
    "tpu.trace_stop"() : () -> ()
    %cst_11 = arith.constant 2.500000e-01 : f32
    %22 = vector.broadcast %cst_11 : f32 to vector<16x16xf32>
    %23 = arith.mulf %21, %22 : vector<16x16xf32>
    %24 = arith.addf %23, %4 : vector<16x16xf32>
    %cst_12 = arith.constant dense<0xFF800000> : vector<16xf32>
    %25 = vector.multi_reduction <maximumf>, %24, %cst_12 [1] : vector<16x16xf32> to vector<16xf32>
    %26 = vector.shape_cast %25 : vector<16xf32> to vector<16x1xf32>
    %27 = vector.broadcast %26 : vector<16x1xf32> to vector<16x16xf32>
    %28 = arith.subf %24, %27 : vector<16x16xf32>
    %29 = math.exp %28 : vector<16x16xf32>
    %cst_13 = arith.constant dense<0.000000e+00> : vector<16xf32>
    %30 = vector.multi_reduction <add>, %29, %cst_13 [1] : vector<16x16xf32> to vector<16xf32>
    %31 = vector.shape_cast %30 : vector<16xf32> to vector<16x1xf32>
    %32 = vector.broadcast %31 : vector<16x1xf32> to vector<16x16xf32>
    %33 = arith.divf %29, %32 : vector<16x16xf32>
    %34 = arith.truncf %33 : vector<16x16xf32> to vector<16x16xbf16>
    %35 = vector.extract_strided_slice %16 {offsets = [0, 0], sizes = [16, 16], strides = [1, 1]} : vector<16x32xf32> to vector<16x16xf32>
    %36 = arith.truncf %35 : vector<16x16xf32> to vector<16x16xbf16>
    %cst_14 = arith.constant dense<0.000000e+00> : vector<16x16xf32>
    %37 = tpu.matmul %34, %36, %cst_14 {dimension_numbers = #tpu.dot_dimension_numbers<[1], [0], [0], [1], [0, 0, 1, 1], [], []>} : vector<16x16xbf16>, vector<16x16xbf16>, vector<16x16xf32> -> vector<16x16xf32>
    %c0_15 = arith.constant 0 : index
    %c0_16 = arith.constant 0 : index
    %38 = vector.load %arg23[%c0_15, %c0_16] : memref<16x32xf32, #tpu.memory_space<vmem>>, vector<16x16xf32>
    tpu.vector_store %arg23[%c0_15, %c0_16], %37 {strides = array<i32>} : memref<16x32xf32, #tpu.memory_space<vmem>>, vector<16x16xf32>,
    %39 = vector.extract_strided_slice %14 {offsets = [0, 16], sizes = [16, 16], strides = [1, 1]} : vector<16x32xf32> to vector<16x16xf32>
    %40 = arith.truncf %39 : vector<16x16xf32> to vector<16x16xbf16>
    %41 = vector.extract_strided_slice %15 {offsets = [0, 16], sizes = [16, 16], strides = [1, 1]} : vector<16x32xf32> to vector<16x16xf32>
    %42 = arith.truncf %41 : vector<16x16xf32> to vector<16x16xbf16>
    "tpu.trace_start"() <{level = 10 : i32, message = "qd,kd->qk"}> : () -> ()
    %cst_17 = arith.constant dense<0.000000e+00> : vector<16x16xf32>
    %43 = tpu.matmul %40, %42, %cst_17 {dimension_numbers = #tpu.dot_dimension_numbers<[1], [1], [0], [0], [0, 0, 1, 0], [], []>} : vector<16x16xbf16>, vector<16x16xbf16>, vector<16x16xf32> -> vector<16x16xf32>
    "tpu.trace_stop"() : () -> ()
    %cst_18 = arith.constant 2.500000e-01 : f32
    %44 = vector.broadcast %cst_18 : f32 to vector<16x16xf32>
    %45 = arith.mulf %43, %44 : vector<16x16xf32>
    %46 = arith.addf %45, %4 : vector<16x16xf32>
    %cst_19 = arith.constant dense<0xFF800000> : vector<16xf32>
    %47 = vector.multi_reduction <maximumf>, %46, %cst_19 [1] : vector<16x16xf32> to vector<16xf32>
    %48 = vector.shape_cast %47 : vector<16xf32> to vector<16x1xf32>
    %49 = vector.broadcast %48 : vector<16x1xf32> to vector<16x16xf32>
    %50 = arith.subf %46, %49 : vector<16x16xf32>
    %51 = math.exp %50 : vector<16x16xf32>
    %cst_20 = arith.constant dense<0.000000e+00> : vector<16xf32>
    %52 = vector.multi_reduction <add>, %51, %cst_20 [1] : vector<16x16xf32> to vector<16xf32>
    %53 = vector.shape_cast %52 : vector<16xf32> to vector<16x1xf32>
    %54 = vector.broadcast %53 : vector<16x1xf32> to vector<16x16xf32>
    %55 = arith.divf %51, %54 : vector<16x16xf32>
    %56 = arith.truncf %55 : vector<16x16xf32> to vector<16x16xbf16>
    %57 = vector.extract_strided_slice %16 {offsets = [0, 16], sizes = [16, 16], strides = [1, 1]} : vector<16x32xf32> to vector<16x16xf32>
    %58 = arith.truncf %57 : vector<16x16xf32> to vector<16x16xbf16>
    %cst_21 = arith.constant dense<0.000000e+00> : vector<16x16xf32>
    %59 = tpu.matmul %56, %58, %cst_21 {dimension_numbers = #tpu.dot_dimension_numbers<[1], [0], [0], [1], [0, 0, 1, 1], [], []>} : vector<16x16xbf16>, vector<16x16xbf16>, vector<16x16xf32> -> vector<16x16xf32>
    %c0_22 = arith.constant 0 : index
    %c16 = arith.constant 16 : index
    %60 = vector.load %arg23[%c0_22, %c16] : memref<16x32xf32, #tpu.memory_space<vmem>>, vector<16x16xf32>
    tpu.vector_store %arg23[%c0_22, %c16], %59 {strides = array<i32>} : memref<16x32xf32, #tpu.memory_space<vmem>>, vector<16x16xf32>,
    %c0_23 = arith.constant 0 : index
    %c0_24 = arith.constant 0 : index
    %61 = vector.load %arg23[%c0_23, %c0_24] : memref<16x32xf32, #tpu.memory_space<vmem>>, vector<16x32xf32>
    %62 = arith.truncf %61 : vector<16x32xf32> to vector<16x32xbf16>
    %c0_25 = arith.constant 0 : index
    %c0_26 = arith.constant 0 : index
    %c0_27 = arith.constant 0 : index
    %63 = vector.load %arg7[%c0_25, %c0_26, %c0_27] : memref<1x32x32xf32, #tpu.memory_space<vmem>>, vector<1x32x32xf32>
    %64 = vector.shape_cast %63 : vector<1x32x32xf32> to vector<32x32xf32>
    %65 = arith.truncf %64 : vector<32x32xf32> to vector<32x32xbf16>
    %cst_28 = arith.constant dense<0.000000e+00> : vector<16x32xf32>
    %66 = tpu.matmul %62, %65, %cst_28 {dimension_numbers = #tpu.dot_dimension_numbers<[1], [0], [0], [1], [0, 0, 1, 1], [], []>} : vector<16x32xbf16>, vector<32x32xbf16>, vector<16x32xf32> -> vector<16x32xf32>
    %c0_29 = arith.constant 0 : index
    %c0_30 = arith.constant 0 : index
    %c0_31 = arith.constant 0 : index
    %67 = vector.load %arg8[%c0_29, %c0_30, %c0_31] : memref<1x1x32xf32, #tpu.memory_space<vmem>>, vector<1x1x32xf32>
    %68 = vector.shape_cast %67 : vector<1x1x32xf32> to vector<1x32xf32>
    %69 = vector.broadcast %68 : vector<1x32xf32> to vector<16x32xf32>
    %70 = arith.addf %66, %69 : vector<16x32xf32>
    %71 = arith.addf %70, %3 : vector<16x32xf32>
    %c0_32 = arith.constant 0 : index
    %c0_33 = arith.constant 0 : index
    %c0_34 = arith.constant 0 : index
    %72 = vector.load %arg9[%c0_32, %c0_33, %c0_34] : memref<1x1x32xf32, #tpu.memory_space<vmem>>, vector<1x1x32xf32>
    %73 = vector.shape_cast %72 : vector<1x1x32xf32> to vector<1x32xf32>
    %c0_35 = arith.constant 0 : index
    %c0_36 = arith.constant 0 : index
    %c0_37 = arith.constant 0 : index
    %74 = vector.load %arg10[%c0_35, %c0_36, %c0_37] : memref<1x1x32xf32, #tpu.memory_space<vmem>>, vector<1x1x32xf32>
    %75 = vector.shape_cast %74 : vector<1x1x32xf32> to vector<1x32xf32>
    %cst_38 = arith.constant dense<0.000000e+00> : vector<16xf32>
    %76 = vector.multi_reduction <add>, %71, %cst_38 [1] : vector<16x32xf32> to vector<16xf32>
    %77 = vector.shape_cast %76 : vector<16xf32> to vector<16x1xf32>
    %cst_39 = arith.constant 3.200000e+01 : f32
    %78 = vector.broadcast %cst_39 : f32 to vector<16x1xf32>
    %79 = arith.divf %77, %78 : vector<16x1xf32>
    %80 = vector.broadcast %79 : vector<16x1xf32> to vector<16x32xf32>
    %81 = arith.subf %71, %80 : vector<16x32xf32>
    %82 = arith.mulf %81, %81 : vector<16x32xf32>
    %cst_40 = arith.constant dense<0.000000e+00> : vector<16xf32>
    %83 = vector.multi_reduction <add>, %82, %cst_40 [1] : vector<16x32xf32> to vector<16xf32>
    %84 = vector.shape_cast %83 : vector<16xf32> to vector<16x1xf32>
    %cst_41 = arith.constant 3.200000e+01 : f32
    %85 = vector.broadcast %cst_41 : f32 to vector<16x1xf32>
    %86 = arith.divf %84, %85 : vector<16x1xf32>
    %87 = vector.broadcast %79 : vector<16x1xf32> to vector<16x32xf32>
    %88 = arith.subf %71, %87 : vector<16x32xf32>
    %cst_42 = arith.constant 9.99999996E-13 : f32
    %89 = vector.broadcast %cst_42 : f32 to vector<16x1xf32>
    %90 = arith.addf %86, %89 : vector<16x1xf32>
    %91 = math.rsqrt %90 : vector<16x1xf32>
    %92 = vector.broadcast %91 : vector<16x1xf32> to vector<16x32xf32>
    %93 = arith.mulf %88, %92 : vector<16x32xf32>
    %94 = vector.broadcast %73 : vector<1x32xf32> to vector<16x32xf32>
    %95 = arith.mulf %93, %94 : vector<16x32xf32>
    %96 = vector.broadcast %75 : vector<1x32xf32> to vector<16x32xf32>
    %97 = arith.addf %95, %96 : vector<16x32xf32>
    %98 = arith.truncf %97 : vector<16x32xf32> to vector<16x32xbf16>
    %c0_43 = arith.constant 0 : index
    %c0_44 = arith.constant 0 : index
    %c0_45 = arith.constant 0 : index
    %99 = vector.load %arg11[%c0_43, %c0_44, %c0_45] : memref<1x32x64xf32, #tpu.memory_space<vmem>>, vector<1x32x64xf32>
    %100 = vector.shape_cast %99 : vector<1x32x64xf32> to vector<32x64xf32>
    %101 = arith.truncf %100 : vector<32x64xf32> to vector<32x64xbf16>
    %cst_46 = arith.constant dense<0.000000e+00> : vector<16x64xf32>
    %102 = tpu.matmul %98, %101, %cst_46 {dimension_numbers = #tpu.dot_dimension_numbers<[1], [0], [0], [1], [0, 0, 1, 1], [], []>} : vector<16x32xbf16>, vector<32x64xbf16>, vector<16x64xf32> -> vector<16x64xf32>
    %c0_47 = arith.constant 0 : index
    %c0_48 = arith.constant 0 : index
    %c0_49 = arith.constant 0 : index
    %103 = vector.load %arg12[%c0_47, %c0_48, %c0_49] : memref<1x1x64xf32, #tpu.memory_space<vmem>>, vector<1x1x64xf32>
    %104 = vector.shape_cast %103 : vector<1x1x64xf32> to vector<1x64xf32>
    %105 = vector.broadcast %104 : vector<1x64xf32> to vector<16x64xf32>
    %106 = arith.addf %102, %105 : vector<16x64xf32>
    %107 = arith.mulf %106, %106 : vector<16x64xf32>
    %108 = arith.mulf %106, %107 : vector<16x64xf32>
    %cst_50 = arith.constant 4.471500e-02 : f32
    %109 = vector.broadcast %cst_50 : f32 to vector<16x64xf32>
    %110 = arith.mulf %109, %108 : vector<16x64xf32>
    %111 = arith.addf %106, %110 : vector<16x64xf32>
    %cst_51 = arith.constant 0.797884583 : f32
    %112 = vector.broadcast %cst_51 : f32 to vector<16x64xf32>
    %113 = arith.mulf %112, %111 : vector<16x64xf32>
    %114 = math.tanh %113 : vector<16x64xf32>
    %cst_52 = arith.constant 1.000000e+00 : f32
    %115 = vector.broadcast %cst_52 : f32 to vector<16x64xf32>
    %116 = arith.addf %115, %114 : vector<16x64xf32>
    %cst_53 = arith.constant 5.000000e-01 : f32
    %117 = vector.broadcast %cst_53 : f32 to vector<16x64xf32>
    %118 = arith.mulf %117, %116 : vector<16x64xf32>
    %119 = arith.mulf %106, %118 : vector<16x64xf32>
    %120 = arith.truncf %119 : vector<16x64xf32> to vector<16x64xbf16>
    %c0_54 = arith.constant 0 : index
    %c0_55 = arith.constant 0 : index
    %c0_56 = arith.constant 0 : index
    %121 = vector.load %arg13[%c0_54, %c0_55, %c0_56] : memref<1x64x32xf32, #tpu.memory_space<vmem>>, vector<1x64x32xf32>
    %122 = vector.shape_cast %121 : vector<1x64x32xf32> to vector<64x32xf32>
    %123 = arith.truncf %122 : vector<64x32xf32> to vector<64x32xbf16>
    %cst_57 = arith.constant dense<0.000000e+00> : vector<16x32xf32>
    %124 = tpu.matmul %120, %123, %cst_57 {dimension_numbers = #tpu.dot_dimension_numbers<[1], [0], [0], [1], [0, 0, 1, 1], [], []>} : vector<16x64xbf16>, vector<64x32xbf16>, vector<16x32xf32> -> vector<16x32xf32>
    %c0_58 = arith.constant 0 : index
    %c0_59 = arith.constant 0 : index
    %c0_60 = arith.constant 0 : index
    %125 = vector.load %arg14[%c0_58, %c0_59, %c0_60] : memref<1x1x32xf32, #tpu.memory_space<vmem>>, vector<1x1x32xf32>
    %126 = vector.shape_cast %125 : vector<1x1x32xf32> to vector<1x32xf32>
    %127 = vector.broadcast %126 : vector<1x32xf32> to vector<16x32xf32>
    %128 = arith.addf %124, %127 : vector<16x32xf32>
    %129 = arith.addf %128, %97 : vector<16x32xf32>
    %c0_61 = arith.constant 0 : index
    %c0_62 = arith.constant 0 : index
    %c0_63 = arith.constant 0 : index
    %130 = vector.load %arg15[%c0_61, %c0_62, %c0_63] : memref<1x1x32xf32, #tpu.memory_space<vmem>>, vector<1x1x32xf32>
    %131 = vector.shape_cast %130 : vector<1x1x32xf32> to vector<1x32xf32>
    %c0_64 = arith.constant 0 : index
    %c0_65 = arith.constant 0 : index
    %c0_66 = arith.constant 0 : index
    %132 = vector.load %arg16[%c0_64, %c0_65, %c0_66] : memref<1x1x32xf32, #tpu.memory_space<vmem>>, vector<1x1x32xf32>
    %133 = vector.shape_cast %132 : vector<1x1x32xf32> to vector<1x32xf32>
    %cst_67 = arith.constant dense<0.000000e+00> : vector<16xf32>
    %134 = vector.multi_reduction <add>, %129, %cst_67 [1] : vector<16x32xf32> to vector<16xf32>
    %135 = vector.shape_cast %134 : vector<16xf32> to vector<16x1xf32>
    %cst_68 = arith.constant 3.200000e+01 : f32
    %136 = vector.broadcast %cst_68 : f32 to vector<16x1xf32>
    %137 = arith.divf %135, %136 : vector<16x1xf32>
    %138 = vector.broadcast %137 : vector<16x1xf32> to vector<16x32xf32>
    %139 = arith.subf %129, %138 : vector<16x32xf32>
    %140 = arith.mulf %139, %139 : vector<16x32xf32>
    %cst_69 = arith.constant dense<0.000000e+00> : vector<16xf32>
    %141 = vector.multi_reduction <add>, %140, %cst_69 [1] : vector<16x32xf32> to vector<16xf32>
    %142 = vector.shape_cast %141 : vector<16xf32> to vector<16x1xf32>
    %cst_70 = arith.constant 3.200000e+01 : f32
    %143 = vector.broadcast %cst_70 : f32 to vector<16x1xf32>
    %144 = arith.divf %142, %143 : vector<16x1xf32>
    %145 = vector.broadcast %137 : vector<16x1xf32> to vector<16x32xf32>
    %146 = arith.subf %129, %145 : vector<16x32xf32>
    %cst_71 = arith.constant 9.99999996E-13 : f32
    %147 = vector.broadcast %cst_71 : f32 to vector<16x1xf32>
    %148 = arith.addf %144, %147 : vector<16x1xf32>
    %149 = math.rsqrt %148 : vector<16x1xf32>
    %150 = vector.broadcast %149 : vector<16x1xf32> to vector<16x32xf32>
    %151 = arith.mulf %146, %150 : vector<16x32xf32>
    %152 = vector.broadcast %131 : vector<1x32xf32> to vector<16x32xf32>
    %153 = arith.mulf %151, %152 : vector<16x32xf32>
    %154 = vector.broadcast %133 : vector<1x32xf32> to vector<16x32xf32>
    %155 = arith.addf %153, %154 : vector<16x32xf32>
    %c0_72 = arith.constant 0 : index
    %c0_73 = arith.constant 0 : index
    %156 = vector.load %arg22[%c0_72, %c0_73] : memref<16x32xf32, #tpu.memory_space<vmem>>, vector<16x32xf32>
    tpu.vector_store %arg22[%c0_72, %c0_73], %155 {strides = array<i32>} : memref<16x32xf32, #tpu.memory_space<vmem>>, vector<16x32xf32>,
    %c1_i32 = arith.constant 1 : i32
    %157 = arith.cmpi eq, %arg0, %c1_i32 : i32
    %158 = arith.extui %157 : i1 to i32
    %c0_i32_74 = arith.constant 0 : i32
    %159 = arith.cmpi ne, %158, %c0_i32_74 : i32
    scf.if %159 {
      %c0_75 = arith.constant 0 : index
      %c0_76 = arith.constant 0 : index
      %160 = tpu.strided_load %arg22[%c0_75, %c0_76] {strides = array<i32: 8, 1>} : memref<16x32xf32, #tpu.memory_space<vmem>>, vector<2x32xf32>
      %161 = arith.truncf %160 : vector<2x32xf32> to vector<2x32xbf16>
      %c0_77 = arith.constant 0 : index
      %c0_78 = arith.constant 0 : index
      %162 = vector.load %arg17[%c0_77, %c0_78] : memref<32x1xf32, #tpu.memory_space<vmem>>, vector<32x1xf32>
      %163 = arith.truncf %162 : vector<32x1xf32> to vector<32x1xbf16>
      %cst_79 = arith.constant dense<0.000000e+00> : vector<2x1xf32>
      %164 = tpu.matmul %161, %163, %cst_79 {dimension_numbers = #tpu.dot_dimension_numbers<[1], [0], [0], [1], [0, 0, 1, 1], [], []>} : vector<2x32xbf16>, vector<32x1xbf16>, vector<2x1xf32> -> vector<2x1xf32>
      %c0_80 = arith.constant 0 : index
      %c0_81 = arith.constant 0 : index
      %165 = vector.load %arg18[%c0_80, %c0_81] : memref<1x1xf32, #tpu.memory_space<vmem>>, vector<1x1xf32>
      %166 = vector.broadcast %165 : vector<1x1xf32> to vector<2x1xf32>
      %167 = arith.addf %164, %166 : vector<2x1xf32>
      %c0_82 = arith.constant 0 : index
      %c0_83 = arith.constant 0 : index
      %168 = vector.load %arg20[%c0_82, %c0_83] : memref<2x1xf32, #tpu.memory_space<vmem>>, vector<2x1xf32>
      tpu.vector_store %arg20[%c0_82, %c0_83], %167 {strides = array<i32>} : memref<2x1xf32, #tpu.memory_space<vmem>>, vector<2x1xf32>,
      %c0_84 = arith.constant 0 : index
      %c0_85 = arith.constant 0 : index
      %169 = vector.load %arg19[%c0_84, %c0_85] : memref<2x1xf32, #tpu.memory_space<vmem>>, vector<2x1xf32>
      %170 = arith.subf %167, %169 : vector<2x1xf32>
      %171 = arith.mulf %170, %170 : vector<2x1xf32>
      %cst_86 = arith.constant dense<0.000000e+00> : vector<1xf32>
      %172 = vector.multi_reduction <add>, %171, %cst_86 [0] : vector<2x1xf32> to vector<1xf32>
      %173 = vector.shape_cast %172 : vector<1xf32> to vector<1x1xf32>
      %cst_87 = arith.constant 5.000000e-01 : f32
      %174 = vector.broadcast %cst_87 : f32 to vector<1x1xf32>
      %175 = arith.mulf %173, %174 : vector<1x1xf32>
      %c0_88 = arith.constant 0 : index
      %c0_89 = arith.constant 0 : index
      %176 = vector.load %arg21[%c0_88, %c0_89] : memref<1x1xf32, #tpu.memory_space<vmem>>, vector<1x1xf32>
      tpu.vector_store %arg21[%c0_88, %c0_89], %175 {strides = array<i32>} : memref<1x1xf32, #tpu.memory_space<vmem>>, vector<1x1xf32>,
    } else {
    }
    return
  }
  func.func @transform_0(%arg0: i32) -> (i32, i32) {
    %c0_i32 = arith.constant 0 : i32
    %c0_i32_0 = arith.constant 0 : i32
    %c0_i32_1 = arith.constant 0 : i32
    return %c0_i32, %c0_i32_0 : i32, i32
  }
  func.func @transform_1(%arg0: i32) -> (i32, i32) {
    %c0_i32 = arith.constant 0 : i32
    %c0_i32_0 = arith.constant 0 : i32
    %c0_i32_1 = arith.constant 0 : i32
    return %c0_i32, %c0_i32_0 : i32, i32
  }
  func.func @transform_2(%arg0: i32) -> (i32, i32) {
    %c0_i32 = arith.constant 0 : i32
    %c0_i32_0 = arith.constant 0 : i32
    %c0_i32_1 = arith.constant 0 : i32
    return %c0_i32, %c0_i32_0 : i32, i32
  }
  func.func @transform_3(%arg0: i32) -> (i32, i32) {
    %c0_i32 = arith.constant 0 : i32
    %c0_i32_0 = arith.constant 0 : i32
    %c0_i32_1 = arith.constant 0 : i32
    return %c0_i32, %c0_i32_0 : i32, i32
  }
  func.func @transform_4(%arg0: i32) -> (i32, i32, i32) {
    %c0_i32 = arith.constant 0 : i32
    %c0_i32_0 = arith.constant 0 : i32
    %c0_i32_1 = arith.constant 0 : i32
    return %arg0, %c0_i32, %c0_i32_0 : i32, i32, i32
  }
  func.func @transform_5(%arg0: i32) -> (i32, i32, i32) {
    %c0_i32 = arith.constant 0 : i32
    %c0_i32_0 = arith.constant 0 : i32
    %c0_i32_1 = arith.constant 0 : i32
    return %arg0, %c0_i32, %c0_i32_0 : i32, i32, i32
  }
  func.func @transform_6(%arg0: i32) -> (i32, i32, i32) {
    %c0_i32 = arith.constant 0 : i32
    %c0_i32_0 = arith.constant 0 : i32
    %c0_i32_1 = arith.constant 0 : i32
    return %arg0, %c0_i32, %c0_i32_0 : i32, i32, i32
  }
  func.func @transform_7(%arg0: i32) -> (i32, i32, i32) {
    %c0_i32 = arith.constant 0 : i32
    %c0_i32_0 = arith.constant 0 : i32
    %c0_i32_1 = arith.constant 0 : i32
    return %arg0, %c0_i32, %c0_i32_0 : i32, i32, i32
  }
  func.func @transform_8(%arg0: i32) -> (i32, i32, i32) {
    %c0_i32 = arith.constant 0 : i32
    %c0_i32_0 = arith.constant 0 : i32
    %c0_i32_1 = arith.constant 0 : i32
    return %arg0, %c0_i32, %c0_i32_0 : i32, i32, i32
  }
  func.func @transform_9(%arg0: i32) -> (i32, i32, i32) {
    %c0_i32 = arith.constant 0 : i32
    %c0_i32_0 = arith.constant 0 : i32
    %c0_i32_1 = arith.constant 0 : i32
    return %arg0, %c0_i32, %c0_i32_0 : i32, i32, i32
  }
  func.func @transform_10(%arg0: i32) -> (i32, i32, i32) {
    %c0_i32 = arith.constant 0 : i32
    %c0_i32_0 = arith.constant 0 : i32
    %c0_i32_1 = arith.constant 0 : i32
    return %arg0, %c0_i32, %c0_i32_0 : i32, i32, i32
  }
  func.func @transform_11(%arg0: i32) -> (i32, i32, i32) {
    %c0_i32 = arith.constant 0 : i32
    %c0_i32_0 = arith.constant 0 : i32
    %c0_i32_1 = arith.constant 0 : i32
    return %arg0, %c0_i32, %c0_i32_0 : i32, i32, i32
  }
  func.func @transform_12(%arg0: i32) -> (i32, i32, i32) {
    %c0_i32 = arith.constant 0 : i32
    %c0_i32_0 = arith.constant 0 : i32
    %c0_i32_1 = arith.constant 0 : i32
    return %arg0, %c0_i32, %c0_i32_0 : i32, i32, i32
  }
  func.func @transform_13(%arg0: i32) -> (i32, i32, i32) {
    %c0_i32 = arith.constant 0 : i32
    %c0_i32_0 = arith.constant 0 : i32
    %c0_i32_1 = arith.constant 0 : i32
    return %arg0, %c0_i32, %c0_i32_0 : i32, i32, i32
  }
  func.func @transform_14(%arg0: i32) -> (i32, i32, i32) {
    %c0_i32 = arith.constant 0 : i32
    %c0_i32_0 = arith.constant 0 : i32
    %c0_i32_1 = arith.constant 0 : i32
    return %arg0, %c0_i32, %c0_i32_0 : i32, i32, i32
  }
  func.func @transform_15(%arg0: i32) -> (i32, i32, i32) {
    %c0_i32 = arith.constant 0 : i32
    %c0_i32_0 = arith.constant 0 : i32
    %c0_i32_1 = arith.constant 0 : i32
    return %arg0, %c0_i32, %c0_i32_0 : i32, i32, i32
  }
  func.func @transform_16(%arg0: i32) -> (i32, i32) {
    %c0_i32 = arith.constant 0 : i32
    %c0_i32_0 = arith.constant 0 : i32
    %c0_i32_1 = arith.constant 0 : i32
    return %c0_i32, %c0_i32_0 : i32, i32
  }
  func.func @transform_17(%arg0: i32) -> (i32, i32) {
    %c0_i32 = arith.constant 0 : i32
    %c0_i32_0 = arith.constant 0 : i32
    %c0_i32_1 = arith.constant 0 : i32
    return %c0_i32, %c0_i32_0 : i32, i32
  }
  func.func @transform_18(%arg0: i32) -> (i32, i32) {
    %c0_i32 = arith.constant 0 : i32
    %c0_i32_0 = arith.constant 0 : i32
    %c0_i32_1 = arith.constant 0 : i32
    return %c0_i32, %c0_i32_0 : i32, i32
  }
  func.func @transform_19(%arg0: i32) -> (i32, i32) {
    %c0_i32 = arith.constant 0 : i32
    %c0_i32_0 = arith.constant 0 : i32
    %c0_i32_1 = arith.constant 0 : i32
    return %c0_i32, %c0_i32_0 : i32, i32
  }
  func.func @transform_20(%arg0: i32) -> (i32, i32) {
    %c0_i32 = arith.constant 0 : i32
    %c0_i32_0 = arith.constant 0 : i32
    %c0_i32_1 = arith.constant 0 : i32
    return %c0_i32, %c0_i32_0 : i32, i32
  }
}

</mosaic_0001>

<llo_original>
// kernel: tpu_custom_call.1
$region0: #{tpu_custom_call.1}
  #allocation0 [shape = 'u32[]', space=smem, size = 0x4, offset = 0x4, fixed_abs, tag = 'smem constant byte address 0x4 - core index']
  #allocation1 [shape = 'u32[144,128]{1,0:T(1,128)}', space=vmem, size = 0x12000, scoped, tag = 'internal scratch']
  #allocation2 [shape = 'f32[16,32]{1,0:T(8,128)}', space=vmem, size = 0x2000, scoped, tag = 'scratch operand']
  #allocation3 [shape = 'f32[16,32]{1,0:T(8,128)}', space=vmem, size = 0x2000, scoped, tag = 'scratch operand']
  #allocation4 [shape = 'f32[1,1]{1,0:T(1,128)S(1)}', space=vmem, size = 0x200, scoped, tag = 'scoped memory for tpu_custom_call.1']
  %s0 = inlined_call_operand.vmem [shape: f32[16,32], index: 0, kind: input, shape index: {}]
  %s1 = inlined_call_operand.hbm [shape: f32[16,16], index: 1, kind: input, shape index: {}]
  %s2 = inlined_call_operand.hbm [shape: f32[1,32], index: 2, kind: input, shape index: {}]
  %s3 = inlined_call_operand.hbm [shape: f32[1,32], index: 3, kind: input, shape index: {}]
  %s4 = inlined_call_operand.vmem [shape: f32[2,32,96], index: 4, kind: input, shape index: {}]
  %s5 = inlined_call_operand.vmem [shape: f32[2,1,96], index: 5, kind: input, shape index: {}]
  %s6 = inlined_call_operand.vmem [shape: f32[2,32,32], index: 6, kind: input, shape index: {}]
  %s7 = inlined_call_operand.vmem [shape: f32[2,1,32], index: 7, kind: input, shape index: {}]
  %s8 = inlined_call_operand.vmem [shape: f32[2,1,32], index: 8, kind: input, shape index: {}]
  %s9 = inlined_call_operand.hbm [shape: f32[2,1,32], index: 9, kind: input, shape index: {}]
  %s10 = inlined_call_operand.vmem [shape: f32[2,32,64], index: 10, kind: input, shape index: {}]
  %s11 = inlined_call_operand.hbm [shape: f32[2,1,64], index: 11, kind: input, shape index: {}]
  %s12 = inlined_call_operand.vmem [shape: f32[2,64,32], index: 12, kind: input, shape index: {}]
  %s13 = inlined_call_operand.vmem [shape: f32[2,1,32], index: 13, kind: input, shape index: {}]
  %s14 = inlined_call_operand.vmem [shape: f32[2,1,32], index: 14, kind: input, shape index: {}]
  %s15 = inlined_call_operand.vmem [shape: f32[2,1,32], index: 15, kind: input, shape index: {}]
  %s16 = inlined_call_operand.vmem [shape: f32[32,1], index: 16, kind: input, shape index: {}]
  %s17 = inlined_call_operand.<no memory space> [shape: f32[1,1], index: 17, kind: input, shape index: {}]
  %s18 = inlined_call_operand.vmem [shape: f32[2,1], index: 18, kind: input, shape index: {}]
  %s19 = inlined_call_operand.vmem [shape: f32[2,1], index: 19, kind: output, shape index: {0}]
  %s20 = inlined_call_operand.hbm [shape: f32[1,1], index: 20, kind: output, shape index: {1}]
  %21 = xla_tuple %s19, %s20
  %s22 = sld [smem:[#allocation0]]
  $region145: #{tpu_custom_call.1} parent=0
    _
  %s24 = ssub.s32 1, %s22
  %s25 = scalar_select 0, %s24, %s22
  %v26 = vstv %s17
  %27 = vst [vmem:[#allocation4] sm:$0x1] %v26
  $region1: #{tpu_custom_call.1} parent=0
    #allocation5 [shape = 'u8[8192]{0}', space=vmem, size = 0x2000, scoped, tag = 'input window, operand 1, single buffered']
    #allocation6 [shape = 's32[2]{0}', space=sflag, size = 0x8, scoped, tag = 'scoped memory for tpu_custom_call.1']
    #allocation7 [shape = 's32[2]{0}', space=sflag, size = 0x8, scoped, tag = 'scoped memory for tpu_custom_call.1']
    #allocation8 [shape = 'u8[512]{0}', space=vmem, size = 0x400, scoped, tag = 'input window, operand 2, single buffered']
    #allocation9 [shape = 's32[1]{0}', space=sflag, size = 0x4, scoped, tag = 'scoped memory for tpu_custom_call.1']
    #allocation10 [shape = 'u8[512]{0}', space=vmem, size = 0x400, scoped, tag = 'input window, operand 3, single buffered']
    #allocation11 [shape = 'u8[1024]{0}', space=vmem, size = 0x400, scoped, tag = 'input window, operand 9']
    #allocation12 [shape = 's32[2]{0}', space=sflag, size = 0x8, scoped, tag = 'scoped memory for tpu_custom_call.1']
    #allocation13 [shape = 'u8[1024]{0}', space=vmem, size = 0x400, scoped, tag = 'input window, operand 11']
    #allocation14 [shape = 'u8[512]{0}', space=vmem, size = 0x400, scoped, tag = 'output window, operand 1, single buffered']
    %28 = vsyncpa [#allocation6], 0
    %29 = vsyncpa [#allocation9], 0
    %30 = vsyncpa [#allocation12], 0
    %s31 = scalar_lea.sflag [#allocation12], 1
    %32 = vsyncpa %s31, 0
    %33 = vsyncpa [#allocation7], 0
    loop: start=0, step=1, limit=4
    $region2: #{tpu_custom_call.1} parent=1 // loop_pre_header
      _
    $region3: #{tpu_custom_call.1} parent=1 // loop_header
      %s35 = sphi 0, %s39
      %p36 = scmp.ge.s32.totalorder %s35, 4
      %s43 = sphi 0, %s43
      %s45 = sphi 0, %s43
      %s46 = sphi 0, %s45
      %s60 = sphi 0, %s46
      %s64 = sphi 0, %s64
      %s66 = sphi 0, %s64
      %s67 = sphi 0, %s66
      %s81 = sphi 0, %s67
      %s85 = sphi 0, %s85
      %s87 = sphi 0, %s85
      %s88 = sphi 0, %s87
      %s102 = sphi 0, %s88
      %s106 = sphi 0, %s106
      %s108 = sphi 0, %s106
      %s109 = sphi 0, %s108
      %s123 = sphi 0, %s109
      %s129 = sphi 0, %s131
      %s132 = sphi 0, %s129
      %s133 = sphi 0, %s132
      %s149 = sphi 0, %s133
      %s155 = sphi 0, %s157
      %s158 = sphi 0, %s155
      %s159 = sphi 0, %s158
      %s175 = sphi 0, %s159
      %s181 = sphi 0, %s183
      %s184 = sphi 0, %s181
      %s185 = sphi 0, %s184
      %s201 = sphi 0, %s185
      %s207 = sphi 0, %s209
      %s210 = sphi 0, %s207
      %s211 = sphi 0, %s210
      %s227 = sphi 0, %s211
      %s233 = sphi 0, %s235
      %s236 = sphi 0, %s233
      %s237 = sphi 0, %s236
      %s253 = sphi 0, %s237
      %s259 = sphi 0, %s261
      %s262 = sphi 0, %s259
      %s263 = sphi 0, %s262
      %s279 = sphi 0, %s263
      %s285 = sphi 0, %s287
      %s288 = sphi 0, %s285
      %s289 = sphi 0, %s288
      %s305 = sphi 0, %s289
      %s311 = sphi 0, %s313
      %s314 = sphi 0, %s311
      %s315 = sphi 0, %s314
      %s331 = sphi 0, %s315
      %s337 = sphi 0, %s339
      %s340 = sphi 0, %s337
      %s341 = sphi 0, %s340
      %s357 = sphi 0, %s341
      %s363 = sphi 0, %s365
      %s366 = sphi 0, %s363
      %s367 = sphi 0, %s366
      %s383 = sphi 0, %s367
      %s389 = sphi 0, %s391
      %s392 = sphi 0, %s389
      %s393 = sphi 0, %s392
      %s409 = sphi 0, %s393
      %s415 = sphi 0, %s417
      %s418 = sphi 0, %s415
      %s419 = sphi 0, %s418
      %s435 = sphi 0, %s419
      %s439 = sphi 0, %s439
      %s441 = sphi 0, %s439
      %s442 = sphi 0, %s441
      %s456 = sphi 0, %s442
      %s460 = sphi 0, %s460
      %s462 = sphi 0, %s460
      %s463 = sphi 0, %s462
      %s477 = sphi 0, %s463
      %s481 = sphi 0, %s481
      %s483 = sphi 0, %s481
      %s484 = sphi 0, %s483
      %s498 = sphi 0, %s484
      %s502 = sphi 0, %s502
      %s504 = sphi 0, %s502
      %s505 = sphi 0, %s504
      %s519 = sphi 0, %s505
      %s523 = sphi 0, %s523
      %s525 = sphi 0, %s523
      %s526 = sphi 0, %s525
      %s540 = sphi 0, %s526
    $region4: #{tpu_custom_call.1} parent=1 // loop_header_branch
      %38 = sbr.rel (%p36) target = $region8
    $region5: #{tpu_custom_call.1} parent=1 // loop_body
      %s40 = ssub.s32 %s35, 1
      %s41 = ssub.s32 %s35, 2
      %s42 = sadd.s32 %s35, 1
      %s44 = sadd.s32 %s43, 1
      %p47 = scmp.eq.s32.totalorder %s35, 1
      %p48 = scmp.ne.s32.totalorder %s43, %s45
      %p49 = scmp.eq.s32.totalorder %s35, 0
      %p50 = por %p48, %p49
      %p51 = scmp.ne.s32.totalorder %s43, %s45
      %p52 = scmp.eq.s32.totalorder %s40, 1
      %p53 = por %p51, %p52
      %p54 = scmp.ne.s32.totalorder %s45, %s46
      %p55 = scmp.eq.s32.totalorder %s40, 0
      %p56 = por %p54, %p55
      %p57 = scmp.ne.s32.totalorder %s45, %s46
      %p58 = scmp.eq.s32.totalorder %s41, 1
      %p59 = por %p57, %p58
      %p61 = scmp.ne.s32.totalorder %s46, %s60
      %p62 = scmp.eq.s32.totalorder %s41, 0
      %p63 = por %p61, %p62
      %s65 = sadd.s32 %s64, 1
      %p68 = scmp.eq.s32.totalorder %s35, 1
      %p69 = scmp.ne.s32.totalorder %s64, %s66
      %p70 = scmp.eq.s32.totalorder %s35, 0
      %p71 = por %p69, %p70
      %p72 = scmp.ne.s32.totalorder %s64, %s66
      %p73 = scmp.eq.s32.totalorder %s40, 1
      %p74 = por %p72, %p73
      %p75 = scmp.ne.s32.totalorder %s66, %s67
      %p76 = scmp.eq.s32.totalorder %s40, 0
      %p77 = por %p75, %p76
      %p78 = scmp.ne.s32.totalorder %s66, %s67
      %p79 = scmp.eq.s32.totalorder %s41, 1
      %p80 = por %p78, %p79
      %p82 = scmp.ne.s32.totalorder %s67, %s81
      %p83 = scmp.eq.s32.totalorder %s41, 0
      %p84 = por %p82, %p83
      %s86 = sadd.s32 %s85, 1
      %p89 = scmp.eq.s32.totalorder %s35, 1
      %p90 = scmp.ne.s32.totalorder %s85, %s87
      %p91 = scmp.eq.s32.totalorder %s35, 0
      %p92 = por %p90, %p91
      %p93 = scmp.ne.s32.totalorder %s85, %s87
      %p94 = scmp.eq.s32.totalorder %s40, 1
      %p95 = por %p93, %p94
      %p96 = scmp.ne.s32.totalorder %s87, %s88
      %p97 = scmp.eq.s32.totalorder %s40, 0
      %p98 = por %p96, %p97
      %p99 = scmp.ne.s32.totalorder %s87, %s88
      %p100 = scmp.eq.s32.totalorder %s41, 1
      %p101 = por %p99, %p100
      %p103 = scmp.ne.s32.totalorder %s88, %s102
      %p104 = scmp.eq.s32.totalorder %s41, 0
      %p105 = por %p103, %p104
      %s107 = sadd.s32 %s106, 1
      %p110 = scmp.eq.s32.totalorder %s35, 1
      %p111 = scmp.ne.s32.totalorder %s106, %s108
      %p112 = scmp.eq.s32.totalorder %s35, 0
      %p113 = por %p111, %p112
      %p114 = scmp.ne.s32.totalorder %s106, %s108
      %p115 = scmp.eq.s32.totalorder %s40, 1
      %p116 = por %p114, %p115
      %p117 = scmp.ne.s32.totalorder %s108, %s109
      %p118 = scmp.eq.s32.totalorder %s40, 0
      %p119 = por %p117, %p118
      %p120 = scmp.ne.s32.totalorder %s108, %s109
      %p121 = scmp.eq.s32.totalorder %s41, 1
      %p122 = por %p120, %p121
      %p124 = scmp.ne.s32.totalorder %s109, %s123
      %p125 = scmp.eq.s32.totalorder %s41, 0
      %p126 = por %p124, %p125
      %s127 = ssub.s32 %s35, %s42
      %p128 = scmp.eq.s32.totalorder %s127, 0
      %s130 = sadd.s32 %s129, 1
      %s131 = scalar_select %p128, %s129, %s130
      %p134 = pneg %p128
      %p135 = scmp.eq.s32.totalorder %s35, 1
      %p136 = por %p134, %p135
      %p137 = scmp.ne.s32.totalorder %s129, %s132
      %p138 = scmp.eq.s32.totalorder %s35, 0
      %p139 = por %p137, %p138
      %p140 = scmp.ne.s32.totalorder %s129, %s132
      %p141 = scmp.eq.s32.totalorder %s40, 1
      %p142 = por %p140, %p141
      %p143 = scmp.ne.s32.totalorder %s132, %s133
      %p144 = scmp.eq.s32.totalorder %s40, 0
      %p145 = por %p143, %p144
      %p146 = scmp.ne.s32.totalorder %s132, %s133
      %p147 = scmp.eq.s32.totalorder %s41, 1
      %p148 = por %p146, %p147
      %p150 = scmp.ne.s32.totalorder %s133, %s149
      %p151 = scmp.eq.s32.totalorder %s41, 0
      %p152 = por %p150, %p151
      %s153 = ssub.s32 %s35, %s42
      %p154 = scmp.eq.s32.totalorder %s153, 0
      %s156 = sadd.s32 %s155, 1
      %s157 = scalar_select %p154, %s155, %s156
      %p160 = pneg %p154
      %p161 = scmp.eq.s32.totalorder %s35, 1
      %p162 = por %p160, %p161
      %p163 = scmp.ne.s32.totalorder %s155, %s158
      %p164 = scmp.eq.s32.totalorder %s35, 0
      %p165 = por %p163, %p164
      %p166 = scmp.ne.s32.totalorder %s155, %s158
      %p167 = scmp.eq.s32.totalorder %s40, 1
      %p168 = por %p166, %p167
      %p169 = scmp.ne.s32.totalorder %s158, %s159
      %p170 = scmp.eq.s32.totalorder %s40, 0
      %p171 = por %p169, %p170
      %p172 = scmp.ne.s32.totalorder %s158, %s159
      %p173 = scmp.eq.s32.totalorder %s41, 1
      %p174 = por %p172, %p173
      %p176 = scmp.ne.s32.totalorder %s159, %s175
      %p177 = scmp.eq.s32.totalorder %s41, 0
      %p178 = por %p176, %p177
      %s179 = ssub.s32 %s35, %s42
      %p180 = scmp.eq.s32.totalorder %s179, 0
      %s182 = sadd.s32 %s181, 1
      %s183 = scalar_select %p180, %s181, %s182
      %p186 = pneg %p180
      %p187 = scmp.eq.s32.totalorder %s35, 1
      %p188 = por %p186, %p187
      %p189 = scmp.ne.s32.totalorder %s181, %s184
      %p190 = scmp.eq.s32.totalorder %s35, 0
      %p191 = por %p189, %p190
      %p192 = scmp.ne.s32.totalorder %s181, %s184
      %p193 = scmp.eq.s32.totalorder %s40, 1
      %p194 = por %p192, %p193
      %p195 = scmp.ne.s32.totalorder %s184, %s185
      %p196 = scmp.eq.s32.totalorder %s40, 0
      %p197 = por %p195, %p196
      %p198 = scmp.ne.s32.totalorder %s184, %s185
      %p199 = scmp.eq.s32.totalorder %s41, 1
      %p200 = por %p198, %p199
      %p202 = scmp.ne.s32.totalorder %s185, %s201
      %p203 = scmp.eq.s32.totalorder %s41, 0
      %p204 = por %p202, %p203
      %s205 = ssub.s32 %s35, %s42
      %p206 = scmp.eq.s32.totalorder %s205, 0
      %s208 = sadd.s32 %s207, 1
      %s209 = scalar_select %p206, %s207, %s208
      %p212 = pneg %p206
      %p213 = scmp.eq.s32.totalorder %s35, 1
      %p214 = por %p212, %p213
      %p215 = scmp.ne.s32.totalorder %s207, %s210
      %p216 = scmp.eq.s32.totalorder %s35, 0
      %p217 = por %p215, %p216
      %p218 = scmp.ne.s32.totalorder %s207, %s210
      %p219 = scmp.eq.s32.totalorder %s40, 1
      %p220 = por %p218, %p219
      %p221 = scmp.ne.s32.totalorder %s210, %s211
      %p222 = scmp.eq.s32.totalorder %s40, 0
      %p223 = por %p221, %p222
      %p224 = scmp.ne.s32.totalorder %s210, %s211
      %p225 = scmp.eq.s32.totalorder %s41, 1
      %p226 = por %p224, %p225
      %p228 = scmp.ne.s32.totalorder %s211, %s227
      %p229 = scmp.eq.s32.totalorder %s41, 0
      %p230 = por %p228, %p229
      %s231 = ssub.s32 %s35, %s42
      %p232 = scmp.eq.s32.totalorder %s231, 0
      %s234 = sadd.s32 %s233, 1
      %s235 = scalar_select %p232, %s233, %s234
      %p238 = pneg %p232
      %p239 = scmp.eq.s32.totalorder %s35, 1
      %p240 = por %p238, %p239
      %p241 = scmp.ne.s32.totalorder %s233, %s236
      %p242 = scmp.eq.s32.totalorder %s35, 0
      %p243 = por %p241, %p242
      %p244 = scmp.ne.s32.totalorder %s233, %s236
      %p245 = scmp.eq.s32.totalorder %s40, 1
      %p246 = por %p244, %p245
      %p247 = scmp.ne.s32.totalorder %s236, %s237
      %p248 = scmp.eq.s32.totalorder %s40, 0
      %p249 = por %p247, %p248
      %p250 = scmp.ne.s32.totalorder %s236, %s237
      %p251 = scmp.eq.s32.totalorder %s41, 1
      %p252 = por %p250, %p251
      %p254 = scmp.ne.s32.totalorder %s237, %s253
      %p255 = scmp.eq.s32.totalorder %s41, 0
      %p256 = por %p254, %p255
      %s257 = ssub.s32 %s35, %s42
      %p258 = scmp.eq.s32.totalorder %s257, 0
      %s260 = sadd.s32 %s259, 1
      %s261 = scalar_select %p258, %s259, %s260
      %p264 = pneg %p258
      %p265 = scmp.eq.s32.totalorder %s35, 1
      %p266 = por %p264, %p265
      %p267 = scmp.ne.s32.totalorder %s259, %s262
      %p268 = scmp.eq.s32.totalorder %s35, 0
      %p269 = por %p267, %p268
      %p270 = scmp.ne.s32.totalorder %s259, %s262
      %p271 = scmp.eq.s32.totalorder %s40, 1
      %p272 = por %p270, %p271
      %p273 = scmp.ne.s32.totalorder %s262, %s263
      %p274 = scmp.eq.s32.totalorder %s40, 0
      %p275 = por %p273, %p274
      %p276 = scmp.ne.s32.totalorder %s262, %s263
      %p277 = scmp.eq.s32.totalorder %s41, 1
      %p278 = por %p276, %p277
      %p280 = scmp.ne.s32.totalorder %s263, %s279
      %p281 = scmp.eq.s32.totalorder %s41, 0
      %p282 = por %p280, %p281
      %s283 = ssub.s32 %s35, %s42
      %p284 = scmp.eq.s32.totalorder %s283, 0
      %s286 = sadd.s32 %s285, 1
      %s287 = scalar_select %p284, %s285, %s286
      %p290 = pneg %p284
      %p291 = scmp.eq.s32.totalorder %s35, 1
      %p292 = por %p290, %p291
      %p293 = scmp.ne.s32.totalorder %s285, %s288
      %p294 = scmp.eq.s32.totalorder %s35, 0
      %p295 = por %p293, %p294
      %p296 = scmp.ne.s32.totalorder %s285, %s288
      %p297 = scmp.eq.s32.totalorder %s40, 1
      %p298 = por %p296, %p297
      %p299 = scmp.ne.s32.totalorder %s288, %s289
      %p300 = scmp.eq.s32.totalorder %s40, 0
      %p301 = por %p299, %p300
      %p302 = scmp.ne.s32.totalorder %s288, %s289
      %p303 = scmp.eq.s32.totalorder %s41, 1
      %p304 = por %p302, %p303
      %p306 = scmp.ne.s32.totalorder %s289, %s305
      %p307 = scmp.eq.s32.totalorder %s41, 0
      %p308 = por %p306, %p307
      %s309 = ssub.s32 %s35, %s42
      %p310 = scmp.eq.s32.totalorder %s309, 0
      %s312 = sadd.s32 %s311, 1
      %s313 = scalar_select %p310, %s311, %s312
      %p316 = pneg %p310
      %p317 = scmp.eq.s32.totalorder %s35, 1
      %p318 = por %p316, %p317
      %p319 = scmp.ne.s32.totalorder %s311, %s314
      %p320 = scmp.eq.s32.totalorder %s35, 0
      %p321 = por %p319, %p320
      %p322 = scmp.ne.s32.totalorder %s311, %s314
      %p323 = scmp.eq.s32.totalorder %s40, 1
      %p324 = por %p322, %p323
      %p325 = scmp.ne.s32.totalorder %s314, %s315
      %p326 = scmp.eq.s32.totalorder %s40, 0
      %p327 = por %p325, %p326
      %p328 = scmp.ne.s32.totalorder %s314, %s315
      %p329 = scmp.eq.s32.totalorder %s41, 1
      %p330 = por %p328, %p329
      %p332 = scmp.ne.s32.totalorder %s315, %s331
      %p333 = scmp.eq.s32.totalorder %s41, 0
      %p334 = por %p332, %p333
      %s335 = ssub.s32 %s35, %s42
      %p336 = scmp.eq.s32.totalorder %s335, 0
      %s338 = sadd.s32 %s337, 1
      %s339 = scalar_select %p336, %s337, %s338
      %p342 = pneg %p336
      %p343 = scmp.eq.s32.totalorder %s35, 1
      %p344 = por %p342, %p343
      %p345 = scmp.ne.s32.totalorder %s337, %s340
      %p346 = scmp.eq.s32.totalorder %s35, 0
      %p347 = por %p345, %p346
      %p348 = scmp.ne.s32.totalorder %s337, %s340
      %p349 = scmp.eq.s32.totalorder %s40, 1
      %p350 = por %p348, %p349
      %p351 = scmp.ne.s32.totalorder %s340, %s341
      %p352 = scmp.eq.s32.totalorder %s40, 0
      %p353 = por %p351, %p352
      %p354 = scmp.ne.s32.totalorder %s340, %s341
      %p355 = scmp.eq.s32.totalorder %s41, 1
      %p356 = por %p354, %p355
      %p358 = scmp.ne.s32.totalorder %s341, %s357
      %p359 = scmp.eq.s32.totalorder %s41, 0
      %p360 = por %p358, %p359
      %s361 = ssub.s32 %s35, %s42
      %p362 = scmp.eq.s32.totalorder %s361, 0
      %s364 = sadd.s32 %s363, 1
      %s365 = scalar_select %p362, %s363, %s364
      %p368 = pneg %p362
      %p369 = scmp.eq.s32.totalorder %s35, 1
      %p370 = por %p368, %p369
      %p371 = scmp.ne.s32.totalorder %s363, %s366
      %p372 = scmp.eq.s32.totalorder %s35, 0
      %p373 = por %p371, %p372
      %p374 = scmp.ne.s32.totalorder %s363, %s366
      %p375 = scmp.eq.s32.totalorder %s40, 1
      %p376 = por %p374, %p375
      %p377 = scmp.ne.s32.totalorder %s366, %s367
      %p378 = scmp.eq.s32.totalorder %s40, 0
      %p379 = por %p377, %p378
      %p380 = scmp.ne.s32.totalorder %s366, %s367
      %p381 = scmp.eq.s32.totalorder %s41, 1
      %p382 = por %p380, %p381
      %p384 = scmp.ne.s32.totalorder %s367, %s383
      %p385 = scmp.eq.s32.totalorder %s41, 0
      %p386 = por %p384, %p385
      %s387 = ssub.s32 %s35, %s42
      %p388 = scmp.eq.s32.totalorder %s387, 0
      %s390 = sadd.s32 %s389, 1
      %s391 = scalar_select %p388, %s389, %s390
      %p394 = pneg %p388
      %p395 = scmp.eq.s32.totalorder %s35, 1
      %p396 = por %p394, %p395
      %p397 = scmp.ne.s32.totalorder %s389, %s392
      %p398 = scmp.eq.s32.totalorder %s35, 0
      %p399 = por %p397, %p398
      %p400 = scmp.ne.s32.totalorder %s389, %s392
      %p401 = scmp.eq.s32.totalorder %s40, 1
      %p402 = por %p400, %p401
      %p403 = scmp.ne.s32.totalorder %s392, %s393
      %p404 = scmp.eq.s32.totalorder %s40, 0
      %p405 = por %p403, %p404
      %p406 = scmp.ne.s32.totalorder %s392, %s393
      %p407 = scmp.eq.s32.totalorder %s41, 1
      %p408 = por %p406, %p407
      %p410 = scmp.ne.s32.totalorder %s393, %s409
      %p411 = scmp.eq.s32.totalorder %s41, 0
      %p412 = por %p410, %p411
      %s413 = ssub.s32 %s35, %s42
      %p414 = scmp.eq.s32.totalorder %s413, 0
      %s416 = sadd.s32 %s415, 1
      %s417 = scalar_select %p414, %s415, %s416
      %p420 = pneg %p414
      %p421 = scmp.eq.s32.totalorder %s35, 1
      %p422 = por %p420, %p421
      %p423 = scmp.ne.s32.totalorder %s415, %s418
      %p424 = scmp.eq.s32.totalorder %s35, 0
      %p425 = por %p423, %p424
      %p426 = scmp.ne.s32.totalorder %s415, %s418
      %p427 = scmp.eq.s32.totalorder %s40, 1
      %p428 = por %p426, %p427
      %p429 = scmp.ne.s32.totalorder %s418, %s419
      %p430 = scmp.eq.s32.totalorder %s40, 0
      %p431 = por %p429, %p430
      %p432 = scmp.ne.s32.totalorder %s418, %s419
      %p433 = scmp.eq.s32.totalorder %s41, 1
      %p434 = por %p432, %p433
      %p436 = scmp.ne.s32.totalorder %s419, %s435
      %p437 = scmp.eq.s32.totalorder %s41, 0
      %p438 = por %p436, %p437
      %s440 = sadd.s32 %s439, 1
      %p443 = scmp.eq.s32.totalorder %s35, 1
      %p444 = scmp.ne.s32.totalorder %s439, %s441
      %p445 = scmp.eq.s32.totalorder %s35, 0
      %p446 = por %p444, %p445
      %p447 = scmp.ne.s32.totalorder %s439, %s441
      %p448 = scmp.eq.s32.totalorder %s40, 1
      %p449 = por %p447, %p448
      %p450 = scmp.ne.s32.totalorder %s441, %s442
      %p451 = scmp.eq.s32.totalorder %s40, 0
      %p452 = por %p450, %p451
      %p453 = scmp.ne.s32.totalorder %s441, %s442
      %p454 = scmp.eq.s32.totalorder %s41, 1
      %p455 = por %p453, %p454
      %p457 = scmp.ne.s32.totalorder %s442, %s456
      %p458 = scmp.eq.s32.totalorder %s41, 0
      %p459 = por %p457, %p458
      %s461 = sadd.s32 %s460, 1
      %p464 = scmp.eq.s32.totalorder %s35, 1
      %p465 = scmp.ne.s32.totalorder %s460, %s462
      %p466 = scmp.eq.s32.totalorder %s35, 0
      %p467 = por %p465, %p466
      %p468 = scmp.ne.s32.totalorder %s460, %s462
      %p469 = scmp.eq.s32.totalorder %s40, 1
      %p470 = por %p468, %p469
      %p471 = scmp.ne.s32.totalorder %s462, %s463
      %p472 = scmp.eq.s32.totalorder %s40, 0
      %p473 = por %p471, %p472
      %p474 = scmp.ne.s32.totalorder %s462, %s463
      %p475 = scmp.eq.s32.totalorder %s41, 1
      %p476 = por %p474, %p475
      %p478 = scmp.ne.s32.totalorder %s463, %s477
      %p479 = scmp.eq.s32.totalorder %s41, 0
      %p480 = por %p478, %p479
      %s482 = sadd.s32 %s481, 1
      %p485 = scmp.eq.s32.totalorder %s35, 1
      %p486 = scmp.ne.s32.totalorder %s481, %s483
      %p487 = scmp.eq.s32.totalorder %s35, 0
      %p488 = por %p486, %p487
      %p489 = scmp.ne.s32.totalorder %s481, %s483
      %p490 = scmp.eq.s32.totalorder %s40, 1
      %p491 = por %p489, %p490
      %p492 = scmp.ne.s32.totalorder %s483, %s484
      %p493 = scmp.eq.s32.totalorder %s40, 0
      %p494 = por %p492, %p493
      %p495 = scmp.ne.s32.totalorder %s483, %s484
      %p496 = scmp.eq.s32.totalorder %s41, 1
      %p497 = por %p495, %p496
      %p499 = scmp.ne.s32.totalorder %s484, %s498
      %p500 = scmp.eq.s32.totalorder %s41, 0
      %p501 = por %p499, %p500
      %s503 = sadd.s32 %s502, 1
      %p506 = scmp.eq.s32.totalorder %s35, 1
      %p507 = scmp.ne.s32.totalorder %s502, %s504
      %p508 = scmp.eq.s32.totalorder %s35, 0
      %p509 = por %p507, %p508
      %p510 = scmp.ne.s32.totalorder %s502, %s504
      %p511 = scmp.eq.s32.totalorder %s40, 1
      %p512 = por %p510, %p511
      %p513 = scmp.ne.s32.totalorder %s504, %s505
      %p514 = scmp.eq.s32.totalorder %s40, 0
      %p515 = por %p513, %p514
      %p516 = scmp.ne.s32.totalorder %s504, %s505
      %p517 = scmp.eq.s32.totalorder %s41, 1
      %p518 = por %p516, %p517
      %p520 = scmp.ne.s32.totalorder %s505, %s519
      %p521 = scmp.eq.s32.totalorder %s41, 0
      %p522 = por %p520, %p521
      %s524 = sadd.s32 %s523, 1
      %p527 = scmp.eq.s32.totalorder %s35, 1
      %p528 = scmp.ne.s32.totalorder %s523, %s525
      %p529 = scmp.eq.s32.totalorder %s35, 0
      %p530 = por %p528, %p529
      %p531 = scmp.ne.s32.totalorder %s523, %s525
      %p532 = scmp.eq.s32.totalorder %s40, 1
      %p533 = por %p531, %p532
      %p534 = scmp.ne.s32.totalorder %s525, %s526
      %p535 = scmp.eq.s32.totalorder %s40, 0
      %p536 = por %p534, %p535
      %p537 = scmp.ne.s32.totalorder %s525, %s526
      %p538 = scmp.eq.s32.totalorder %s41, 1
      %p539 = por %p537, %p538
      %p541 = scmp.ne.s32.totalorder %s526, %s540
      %p542 = scmp.eq.s32.totalorder %s41, 0
      %p543 = por %p541, %p542
      %p544 = scmp.le.s32.totalorder 1, %s35
      %p545 = scmp.lt.s32.totalorder %s35, 3
      %p546 = pnand %p544, %p545
      %p547 = pneg %p546
      // Predicated region
      $region9: #{tpu_custom_call.1} parent=5 // pred_check
        _
      $region10: #{tpu_custom_call.1} parent=5 // pred_check_branch
        %549 = sbr.rel (%p546) target = $region12
      $region11: #{tpu_custom_call.1} parent=5 // pred_region
        %s550 = ssub.s32 %s35, 1
        // Predicated region
        $region13: #{tpu_custom_call.1} parent=11 // pred_check
          %p551 = pneg %p56
        $region14: #{tpu_custom_call.1} parent=11 // pred_check_branch
          %553 = sbr.rel (%p551) target = $region16
        $region15: #{tpu_custom_call.1} parent=11 // pred_region
          _
        $region16: #{tpu_custom_call.1} parent=11 // pred_fallthru
          _
        // Predicated region
        $region17: #{tpu_custom_call.1} parent=11 // pred_check
          %p554 = pneg %p77
        $region18: #{tpu_custom_call.1} parent=11 // pred_check_branch
          %556 = sbr.rel (%p554) target = $region20
        $region19: #{tpu_custom_call.1} parent=11 // pred_region
          %s558 = ssub.s32 256, 256
          %559 = vsyncadd [#allocation6], %s558
          %s560 = sshll.u32 [#allocation5], 4
          %s561 = int_to_ptr.vmem [resolvable:$true] %s560
          %566 = dma.hbm_to_vmem [thread:$0]  %s1, 256, %s561, [#allocation6], 128, 128, 8
        $region20: #{tpu_custom_call.1} parent=11 // pred_fallthru
          _
        // Predicated region
        $region21: #{tpu_custom_call.1} parent=11 // pred_check
          %p567 = pneg %p98
        $region22: #{tpu_custom_call.1} parent=11 // pred_check_branch
          %569 = sbr.rel (%p567) target = $region24
        $region23: #{tpu_custom_call.1} parent=11 // pred_region
          %s571 = ssub.s32 16, 16
          %572 = vsyncadd [#allocation9], %s571
          %s574 = sshll.u32 [#allocation8], 4
          %s575 = int_to_ptr.vmem [resolvable:$true] %s574
          %577 = dma.hbm_to_vmem [thread:$0]  %s2, 16, %s575, [#allocation9]
        $region24: #{tpu_custom_call.1} parent=11 // pred_fallthru
          _
        // Predicated region
        $region25: #{tpu_custom_call.1} parent=11 // pred_check
          %p578 = pneg %p119
        $region26: #{tpu_custom_call.1} parent=11 // pred_check_branch
          %580 = sbr.rel (%p578) target = $region28
        $region27: #{tpu_custom_call.1} parent=11 // pred_region
          %s582 = ssub.s32 16, 16
          %583 = vsyncadd [#allocation9], %s582
          %s585 = sshll.u32 [#allocation10], 4
          %s586 = int_to_ptr.vmem [resolvable:$true] %s585
          %588 = dma.hbm_to_vmem [thread:$0]  %s3, 16, %s586, [#allocation9]
        $region28: #{tpu_custom_call.1} parent=11 // pred_fallthru
          _
        // Predicated region
        $region29: #{tpu_custom_call.1} parent=11 // pred_check
          %p589 = pneg %p452
        $region30: #{tpu_custom_call.1} parent=11 // pred_check_branch
          %591 = sbr.rel (%p589) target = $region32
        $region31: #{tpu_custom_call.1} parent=11 // pred_region
          _
        $region32: #{tpu_custom_call.1} parent=11 // pred_fallthru
          _
        // Predicated region
        $region33: #{tpu_custom_call.1} parent=11 // pred_check
          %p592 = pneg %p473
        $region34: #{tpu_custom_call.1} parent=11 // pred_check_branch
          %594 = sbr.rel (%p592) target = $region36
        $region35: #{tpu_custom_call.1} parent=11 // pred_region
          _
        $region36: #{tpu_custom_call.1} parent=11 // pred_fallthru
          _
        // Predicated region
        $region37: #{tpu_custom_call.1} parent=11 // pred_check
          %p595 = pneg %p494
        $region38: #{tpu_custom_call.1} parent=11 // pred_check_branch
          %597 = sbr.rel (%p595) target = $region40
        $region39: #{tpu_custom_call.1} parent=11 // pred_region
          _
        $region40: #{tpu_custom_call.1} parent=11 // pred_fallthru
          _
      $region12: #{tpu_custom_call.1} parent=5 // pred_fallthru
        _
      %p598 = scmp.lt.s32.totalorder %s35, 2
      // Predicated region
      $region41: #{tpu_custom_call.1} parent=5 // pred_check
        %p599 = pneg %p598
      $region42: #{tpu_custom_call.1} parent=5 // pred_check_branch
        %601 = sbr.rel (%p599) target = $region44
      $region43: #{tpu_custom_call.1} parent=5 // pred_region
        // Predicated region
        $region45: #{tpu_custom_call.1} parent=43 // pred_check
          %p602 = pneg %p139
        $region46: #{tpu_custom_call.1} parent=43 // pred_check_branch
          %604 = sbr.rel (%p602) target = $region48
        $region47: #{tpu_custom_call.1} parent=43 // pred_region
          %p605 = scmp.lt.s32.totalorder %s35, 1
          %s606 = scalar_select %p605, %s35, 1
          %s607 = smul.addr %s606, 4
          %s608 = smul.addr %s607, 8
          %s609 = scalar_lea.vmem %s4, %s608
        $region48: #{tpu_custom_call.1} parent=43 // pred_fallthru
          _
        // Predicated region
        $region49: #{tpu_custom_call.1} parent=43 // pred_check
          %p610 = pneg %p165
        $region50: #{tpu_custom_call.1} parent=43 // pred_check_branch
          %612 = sbr.rel (%p610) target = $region52
        $region51: #{tpu_custom_call.1} parent=43 // pred_region
          %p613 = scmp.lt.s32.totalorder %s35, 1
          %s614 = scalar_select %p613, %s35, 1
          %s615 = scalar_lea.vmem %s5, %s614
        $region52: #{tpu_custom_call.1} parent=43 // pred_fallthru
          _
        // Predicated region
        $region53: #{tpu_custom_call.1} parent=43 // pred_check
          %p616 = pneg %p191
        $region54: #{tpu_custom_call.1} parent=43 // pred_check_branch
          %618 = sbr.rel (%p616) target = $region56
        $region55: #{tpu_custom_call.1} parent=43 // pred_region
          %p619 = scmp.lt.s32.totalorder %s35, 1
          %s620 = scalar_select %p619, %s35, 1
          %s621 = smul.addr %s620, 4
          %s622 = smul.addr %s621, 8
          %s623 = scalar_lea.vmem %s6, %s622
        $region56: #{tpu_custom_call.1} parent=43 // pred_fallthru
          _
        // Predicated region
        $region57: #{tpu_custom_call.1} parent=43 // pred_check
          %p624 = pneg %p217
        $region58: #{tpu_custom_call.1} parent=43 // pred_check_branch
          %626 = sbr.rel (%p624) target = $region60
        $region59: #{tpu_custom_call.1} parent=43 // pred_region
          %p627 = scmp.lt.s32.totalorder %s35, 1
          %s628 = scalar_select %p627, %s35, 1
          %s629 = scalar_lea.vmem %s7, %s628
        $region60: #{tpu_custom_call.1} parent=43 // pred_fallthru
          _
        // Predicated region
        $region61: #{tpu_custom_call.1} parent=43 // pred_check
          %p630 = pneg %p243
        $region62: #{tpu_custom_call.1} parent=43 // pred_check_branch
          %632 = sbr.rel (%p630) target = $region64
        $region63: #{tpu_custom_call.1} parent=43 // pred_region
          %p633 = scmp.lt.s32.totalorder %s35, 1
          %s634 = scalar_select %p633, %s35, 1
          %s635 = scalar_lea.vmem %s8, %s634
        $region64: #{tpu_custom_call.1} parent=43 // pred_fallthru
          _
        // Predicated region
        $region65: #{tpu_custom_call.1} parent=43 // pred_check
          %p636 = pneg %p269
        $region66: #{tpu_custom_call.1} parent=43 // pred_check_branch
          %638 = sbr.rel (%p636) target = $region68
        $region67: #{tpu_custom_call.1} parent=43 // pred_region
          %s639 = sand.u32 %s35, 1
          %s640 = scalar_lea.sflag [#allocation12], %s639
          %s641 = sand.u32 %s259, 1
          %s642 = scalar_lea.vmem [#allocation11], %s641
          %s644 = ssub.s32 16, 16
          %645 = vsyncadd %s640, %s644
          %s646 = smul.addr %s35, 16
          %s647 = scalar_lea.hbm %s9, %s646
          %s649 = sshll.u32 %s642, 4
          %s650 = int_to_ptr.vmem [resolvable:$true] %s649
          %652 = dma.hbm_to_vmem [thread:$0]  %s647, 16, %s650, %s640
        $region68: #{tpu_custom_call.1} parent=43 // pred_fallthru
          _
        // Predicated region
        $region69: #{tpu_custom_call.1} parent=43 // pred_check
          %p653 = pneg %p295
        $region70: #{tpu_custom_call.1} parent=43 // pred_check_branch
          %655 = sbr.rel (%p653) target = $region72
        $region71: #{tpu_custom_call.1} parent=43 // pred_region
          %p656 = scmp.lt.s32.totalorder %s35, 1
          %s657 = scalar_select %p656, %s35, 1
          %s658 = smul.addr %s657, 4
          %s659 = smul.addr %s658, 8
          %s660 = scalar_lea.vmem %s10, %s659
        $region72: #{tpu_custom_call.1} parent=43 // pred_fallthru
          _
        // Predicated region
        $region73: #{tpu_custom_call.1} parent=43 // pred_check
          %p661 = pneg %p321
        $region74: #{tpu_custom_call.1} parent=43 // pred_check_branch
          %663 = sbr.rel (%p661) target = $region76
        $region75: #{tpu_custom_call.1} parent=43 // pred_region
          %s664 = sand.u32 %s35, 1
          %s665 = scalar_lea.sflag [#allocation12], %s664
          %s666 = sand.u32 %s311, 1
          %s667 = scalar_lea.vmem [#allocation13], %s666
          %s669 = ssub.s32 16, 16
          %670 = vsyncadd %s665, %s669
          %s671 = smul.addr %s35, 16
          %s672 = scalar_lea.hbm %s11, %s671
          %s674 = sshll.u32 %s667, 4
          %s675 = int_to_ptr.vmem [resolvable:$true] %s674
          %677 = dma.hbm_to_vmem [thread:$0]  %s672, 16, %s675, %s665
        $region76: #{tpu_custom_call.1} parent=43 // pred_fallthru
          _
        // Predicated region
        $region77: #{tpu_custom_call.1} parent=43 // pred_check
          %p678 = pneg %p347
        $region78: #{tpu_custom_call.1} parent=43 // pred_check_branch
          %680 = sbr.rel (%p678) target = $region80
        $region79: #{tpu_custom_call.1} parent=43 // pred_region
          %p681 = scmp.lt.s32.totalorder %s35, 1
          %s682 = scalar_select %p681, %s35, 1
          %s683 = smul.addr %s682, 8
          %s684 = smul.addr %s683, 8
          %s685 = scalar_lea.vmem %s12, %s684
        $region80: #{tpu_custom_call.1} parent=43 // pred_fallthru
          _
        // Predicated region
        $region81: #{tpu_custom_call.1} parent=43 // pred_check
          %p686 = pneg %p373
        $region82: #{tpu_custom_call.1} parent=43 // pred_check_branch
          %688 = sbr.rel (%p686) target = $region84
        $region83: #{tpu_custom_call.1} parent=43 // pred_region
          %p689 = scmp.lt.s32.totalorder %s35, 1
          %s690 = scalar_select %p689, %s35, 1
          %s691 = scalar_lea.vmem %s13, %s690
        $region84: #{tpu_custom_call.1} parent=43 // pred_fallthru
          _
        // Predicated region
        $region85: #{tpu_custom_call.1} parent=43 // pred_check
          %p692 = pneg %p399
        $region86: #{tpu_custom_call.1} parent=43 // pred_check_branch
          %694 = sbr.rel (%p692) target = $region88
        $region87: #{tpu_custom_call.1} parent=43 // pred_region
          %p695 = scmp.lt.s32.totalorder %s35, 1
          %s696 = scalar_select %p695, %s35, 1
          %s697 = scalar_lea.vmem %s14, %s696
        $region88: #{tpu_custom_call.1} parent=43 // pred_fallthru
          _
        // Predicated region
        $region89: #{tpu_custom_call.1} parent=43 // pred_check
          %p698 = pneg %p425
        $region90: #{tpu_custom_call.1} parent=43 // pred_check_branch
          %700 = sbr.rel (%p698) target = $region92
        $region91: #{tpu_custom_call.1} parent=43 // pred_region
          %p701 = scmp.lt.s32.totalorder %s35, 1
          %s702 = scalar_select %p701, %s35, 1
          %s703 = scalar_lea.vmem %s15, %s702
        $region92: #{tpu_custom_call.1} parent=43 // pred_fallthru
          _
      $region44: #{tpu_custom_call.1} parent=5 // pred_fallthru
        _
      %p704 = scmp.le.s32.totalorder 1, %s35
      %p705 = scmp.lt.s32.totalorder %s35, 3
      %p706 = pnand %p704, %p705
      %p707 = pneg %p706
      // Predicated region
      $region93: #{tpu_custom_call.1} parent=5 // pred_check
        _
      $region94: #{tpu_custom_call.1} parent=5 // pred_check_branch
        %709 = sbr.rel (%p706) target = $region96
      $region95: #{tpu_custom_call.1} parent=5 // pred_region
        %s710 = ssub.s32 %s35, 1
        // Predicated region
        $region97: #{tpu_custom_call.1} parent=95 // pred_check
          %p711 = pneg %p77
        $region98: #{tpu_custom_call.1} parent=95 // pred_check_branch
          %713 = sbr.rel (%p711) target = $region100
        $region99: #{tpu_custom_call.1} parent=95 // pred_region
          %714 = dma.done [#allocation6], 256
        $region100: #{tpu_custom_call.1} parent=95 // pred_fallthru
          _
        // Predicated region
        $region101: #{tpu_custom_call.1} parent=95 // pred_check
          %p715 = pneg %p98
        $region102: #{tpu_custom_call.1} parent=95 // pred_check_branch
          %717 = sbr.rel (%p715) target = $region104
        $region103: #{tpu_custom_call.1} parent=95 // pred_region
          %718 = dma.done [#allocation9], 16
        $region104: #{tpu_custom_call.1} parent=95 // pred_fallthru
          _
        // Predicated region
        $region105: #{tpu_custom_call.1} parent=95 // pred_check
          %p719 = pneg %p119
        $region106: #{tpu_custom_call.1} parent=95 // pred_check_branch
          %721 = sbr.rel (%p719) target = $region108
        $region107: #{tpu_custom_call.1} parent=95 // pred_region
          %722 = dma.done [#allocation9], 16
        $region108: #{tpu_custom_call.1} parent=95 // pred_fallthru
          _
        %s723 = sand.u32 %s40, 1
        %s724 = scalar_lea.sflag [#allocation12], %s723
        %s725 = sand.u32 %s262, 1
        %s726 = scalar_lea.vmem [#allocation11], %s725
        // Predicated region
        $region109: #{tpu_custom_call.1} parent=95 // pred_check
          %p727 = pneg %p275
        $region110: #{tpu_custom_call.1} parent=95 // pred_check_branch
          %729 = sbr.rel (%p727) target = $region112
        $region111: #{tpu_custom_call.1} parent=95 // pred_region
          %730 = dma.done %s724, 16
        $region112: #{tpu_custom_call.1} parent=95 // pred_fallthru
          _
        %s731 = sand.u32 %s40, 1
        %s732 = scalar_lea.sflag [#allocation12], %s731
        %s733 = sand.u32 %s314, 1
        %s734 = scalar_lea.vmem [#allocation13], %s733
        // Predicated region
        $region113: #{tpu_custom_call.1} parent=95 // pred_check
          %p735 = pneg %p327
        $region114: #{tpu_custom_call.1} parent=95 // pred_check_branch
          %737 = sbr.rel (%p735) target = $region116
        $region115: #{tpu_custom_call.1} parent=95 // pred_region
          %738 = dma.done %s732, 16
        $region116: #{tpu_custom_call.1} parent=95 // pred_fallthru
          _
        %p739 = pneg %p56
        %p740 = pneg %p53
        %p741 = pneg %p77
        %p742 = pneg %p74
        %p743 = pneg %p98
        %p744 = pneg %p95
        %p745 = pneg %p119
        %p746 = pneg %p116
        %p747 = scmp.lt.s32.totalorder %s40, 1
        %s748 = scalar_select %p747, %s40, 1
        %s749 = smul.addr %s748, 4
        %s750 = smul.addr %s749, 8
        %s751 = scalar_lea.vmem %s4, %s750
        %p752 = pneg %p145
        %p753 = pneg %p142
        %p754 = scmp.lt.s32.totalorder %s40, 1
        %s755 = scalar_select %p754, %s40, 1
        %s756 = scalar_lea.vmem %s5, %s755
        %p757 = pneg %p171
        %p758 = pneg %p168
        %p759 = scmp.lt.s32.totalorder %s40, 1
        %s760 = scalar_select %p759, %s40, 1
        %s761 = smul.addr %s760, 4
        %s762 = smul.addr %s761, 8
        %s763 = scalar_lea.vmem %s6, %s762
        %p764 = pneg %p197
        %p765 = pneg %p194
        %p766 = scmp.lt.s32.totalorder %s40, 1
        %s767 = scalar_select %p766, %s40, 1
        %s768 = scalar_lea.vmem %s7, %s767
        %p769 = pneg %p223
        %p770 = pneg %p220
        %p771 = scmp.lt.s32.totalorder %s40, 1
        %s772 = scalar_select %p771, %s40, 1
        %s773 = scalar_lea.vmem %s8, %s772
        %p774 = pneg %p249
        %p775 = pneg %p246
        %s776 = sand.u32 %s40, 1
        %s777 = scalar_lea.sflag [#allocation12], %s776
        %s778 = sand.u32 %s262, 1
        %s779 = scalar_lea.vmem [#allocation11], %s778
        %p780 = pneg %p275
        %p781 = pneg %p272
        %p782 = scmp.lt.s32.totalorder %s40, 1
        %s783 = scalar_select %p782, %s40, 1
        %s784 = smul.addr %s783, 4
        %s785 = smul.addr %s784, 8
        %s786 = scalar_lea.vmem %s10, %s785
        %p787 = pneg %p301
        %p788 = pneg %p298
        %s789 = sand.u32 %s40, 1
        %s790 = scalar_lea.sflag [#allocation12], %s789
        %s791 = sand.u32 %s314, 1
        %s792 = scalar_lea.vmem [#allocation13], %s791
        %p793 = pneg %p327
        %p794 = pneg %p324
        %p795 = scmp.lt.s32.totalorder %s40, 1
        %s796 = scalar_select %p795, %s40, 1
        %s797 = smul.addr %s796, 8
        %s798 = smul.addr %s797, 8
        %s799 = scalar_lea.vmem %s12, %s798
        %p800 = pneg %p353
        %p801 = pneg %p350
        %p802 = scmp.lt.s32.totalorder %s40, 1
        %s803 = scalar_select %p802, %s40, 1
        %s804 = scalar_lea.vmem %s13, %s803
        %p805 = pneg %p379
        %p806 = pneg %p376
        %p807 = scmp.lt.s32.totalorder %s40, 1
        %s808 = scalar_select %p807, %s40, 1
        %s809 = scalar_lea.vmem %s14, %s808
        %p810 = pneg %p405
        %p811 = pneg %p402
        %p812 = scmp.lt.s32.totalorder %s40, 1
        %s813 = scalar_select %p812, %s40, 1
        %s814 = scalar_lea.vmem %s15, %s813
        %p815 = pneg %p431
        %p816 = pneg %p428
        %p817 = pneg %p452
        %p818 = pneg %p449
        %p819 = pneg %p473
        %p820 = pneg %p470
        %p821 = pneg %p494
        %p822 = pneg %p491
        %p823 = pneg %p515
        %p824 = pneg %p512
        %p825 = pneg %p536
        %p826 = pneg %p533
        %p827 = scmp.lt.s32.totalorder %s40, 1
        %s828 = scalar_select %p827, %s40, 1
        %s829 = smul.addr %s828, 4
        %s830 = smul.addr %s829, 8
        %s831 = scalar_lea.vmem %s4, %s830
        %p832 = scmp.lt.s32.totalorder %s40, 1
        %s833 = scalar_select %p832, %s40, 1
        %s834 = scalar_lea.vmem %s5, %s833
        %p835 = scmp.lt.s32.totalorder %s40, 1
        %s836 = scalar_select %p835, %s40, 1
        %s837 = smul.addr %s836, 4
        %s838 = smul.addr %s837, 8
        %s839 = scalar_lea.vmem %s6, %s838
        %p840 = scmp.lt.s32.totalorder %s40, 1
        %s841 = scalar_select %p840, %s40, 1
        %s842 = scalar_lea.vmem %s7, %s841
        %p843 = scmp.lt.s32.totalorder %s40, 1
        %s844 = scalar_select %p843, %s40, 1
        %s845 = scalar_lea.vmem %s8, %s844
        %p846 = scmp.lt.s32.totalorder %s40, 1
        %s847 = scalar_select %p846, %s40, 1
        %s848 = smul.addr %s847, 4
        %s849 = smul.addr %s848, 8
        %s850 = scalar_lea.vmem %s10, %s849
        %p851 = scmp.lt.s32.totalorder %s40, 1
        %s852 = scalar_select %p851, %s40, 1
        %s853 = smul.addr %s852, 8
        %s854 = smul.addr %s853, 8
        %s855 = scalar_lea.vmem %s12, %s854
        %p856 = scmp.lt.s32.totalorder %s40, 1
        %s857 = scalar_select %p856, %s40, 1
        %s858 = scalar_lea.vmem %s13, %s857
        %p859 = scmp.lt.s32.totalorder %s40, 1
        %s860 = scalar_select %p859, %s40, 1
        %s861 = scalar_lea.vmem %s14, %s860
        %p862 = scmp.lt.s32.totalorder %s40, 1
        %s863 = scalar_select %p862, %s40, 1
        %s864 = scalar_lea.vmem %s15, %s863
        %p866 = scmp.eq.s32.totalorder %s40, 0
        // Predicated region
        $region117: #{tpu_custom_call.1} parent=95 // pred_check
          %p867 = pneg %p866
        $region118: #{tpu_custom_call.1} parent=95 // pred_check_branch
          %869 = sbr.rel (%p867) target = $region120
        $region119: #{tpu_custom_call.1} parent=95 // pred_region
          %v870 = vld [vmem:[%s0] sm:$0xff]
          %v871 = vld [vmem:[%s0 + $0x8] sm:$0xff]
          %v872 = vld [vmem:[#allocation8] sm:$0x1]
          %v873 = vld [vmem:[#allocation10] sm:$0x1]
          %vm874 = vcmask 261120
          %v875 = vsel %vm874, %v870, 0.0
          %876 = vadd.xlane.f32.xlu0 %v875
          %v877 = vpop.xlane.xlu0 %876
          %v878 = vsel %vm874, %v871, 0.0
          %879 = vadd.xlane.f32.xlu0 %v878
          %v880 = vpop.xlane.xlu0 %879
          %v881 = vrcp.pop 32.0
          %v882 = vmul.f32 %v877, %v881
          %v883 = vmul.f32 %v880, %v881
          %v884 = vsub.f32 %v870, %v882
          %v885 = vsub.f32 %v871, %v883
          %v886 = vmul.f32 %v884, %v884
          %v887 = vmul.f32 %v885, %v885
          %v888 = vsel %vm874, %v886, 0.0
          %889 = vadd.xlane.f32.xlu0 %v888
          %v890 = vpop.xlane.xlu0 %889
          %v891 = vsel %vm874, %v887, 0.0
          %892 = vadd.xlane.f32.xlu0 %v891
          %v893 = vpop.xlane.xlu0 %892
          %v894 = vmul.f32 %v890, %v881
          %v895 = vmul.f32 %v893, %v881
          %v896 = vadd.f32 %v894, 1e-12
          %v897 = vadd.f32 %v895, 1e-12
          %v898 = vrsqrt.pop %v896
          %v899 = vrsqrt.pop %v897
          %v900 = vmul.f32 %v884, %v898
          %v901 = vmul.f32 %v885, %v899
          %v903 = vlaneseq
          %v904 = vshrl.u32 %v903, 7
          %v905 = vsub.s32 0, %v904
          %v906 = vrot.slane %v872, %v905
          %v908 = vmul.f32 %v900, %v906
          %v909 = vmul.f32 %v901, %v906
          %v911 = vlaneseq
          %v912 = vshrl.u32 %v911, 7
          %v913 = vsub.s32 0, %v912
          %v914 = vrot.slane %v873, %v913
          %v916 = vadd.f32 %v908, %v914
          %v917 = vadd.f32 %v909, %v914
          %918 = vst.msk [vmem:[#allocation2] sm:$0xff] %vm874, %v916
          %919 = vst.msk [vmem:[#allocation2 + $0x8] sm:$0xff] %vm874, %v917
        $region120: #{tpu_custom_call.1} parent=95 // pred_fallthru
          _
        %v920 = vld [vmem:[#allocation2] sm:$0xff]
        %v921 = vld [vmem:[#allocation2 + $0x8] sm:$0xff]
        %v922 = vld [vmem:[#allocation5] sm:$0xff]
        %v923 = vld [vmem:[#allocation5 + $0x8] sm:$0xff]
        %v924 = vpack.c.bf16 %v921, %v920
        %v925 = vld [vmem:[%s831] sm:$0xff]
        %v926 = vld [vmem:[%s831 + $0x8] sm:$0xff]
        %v927 = vld [vmem:[%s831 + $0x10] sm:$0xff]
        %v928 = vld [vmem:[%s831 + $0x18] sm:$0xff]
        %v929 = vpack.c.bf16 %v926, %v925
        %v930 = vpack.c.bf16 %v928, %v927
        %v931 = vld [vmem:[%s834] sm:$0x1]
        %v933 = vlaneseq
        %v934 = vshrl.u32 %v933, 7
        %v935 = vsub.s32 0, %v934
        %v936 = vrot.slane %v931, %v935
        %vm938 = vcmask 261120
        %v940 = vsel %vm938, %v924, 0
        %942 = vmatprep.subr.bf16.mxu0 0
        %943 = vmatpush1.bf16.msra.mxu0 %v929
        %944 = vmatprep.subr.bf16.mxu0 0
        %945 = vmatpush1.bf16.msra.mxu0 %v930
        %946 = vmatprep.subr.bf16.mxu0 0
        %947 = vmatpush1.bf16.msra.mxu0 0
        %948 = vmatprep.subr.bf16.mxu0 0
        %949 = vmatpush1.bf16.msra.mxu0 0
        %950 = vmatprep.subr.bf16.mxu0 0
        %951 = vmatpush1.bf16.msra.mxu0 0
        %952 = vmatprep.subr.bf16.mxu0 0
        %953 = vmatpush1.bf16.msra.mxu0 0
        %954 = vmatprep.subr.bf16.mxu0 0
        %955 = vmatpush1.bf16.msra.mxu0 0
        %956 = vmatprep.subr.bf16.mxu0 0
        %957 = vmatpush1.bf16.msra.mxu0 0
        %958 = vmatprep.subr.bf16.mxu0 0
        %959 = vmatpush1.bf16.msra.mxu0 0
        %960 = vmatprep.subr.bf16.mxu0 0
        %961 = vmatpush1.bf16.msra.mxu0 0
        %962 = vmatprep.subr.bf16.mxu0 0
        %963 = vmatpush1.bf16.msra.mxu0 0
        %964 = vmatprep.subr.bf16.mxu0 0
        %965 = vmatpush1.bf16.msra.mxu0 0
        %966 = vmatprep.subr.bf16.mxu0 0
        %967 = vmatpush1.bf16.msra.mxu0 0
        %968 = vmatprep.subr.bf16.mxu0 0
        %969 = vmatpush1.bf16.msra.mxu0 0
        %970 = vmatprep.subr.bf16.mxu0 0
        %971 = vmatpush1.bf16.msra.mxu0 0
        %972 = vmatprep.subr.bf16.mxu0 0
        %973 = vmatpush1.bf16.msra.mxu0 0
        %974 = vmatprep.mubr.bf16.mxu0 0
        %975 = vmatmul.mubr.bf16.gmra.mrb[0].mxu0 %v940
        %v976 = vpop.f32.mrb[0].mxu0
        %v977 = vadd.f32 %v936, %v976
        %v978 = vpop.f32.mrb[0].mxu0
        %v979 = vpop.f32.mrb[0].mxu0
        %v980 = vadd.f32 %v936, %v979
        %v981 = vpop.f32.mrb[0].mxu0
        %982 = vdwg.mxu0
        %v983 = vpack.c.bf16 %v980, %v977
        %985 = vrot.lane.b32.xlu0 %v983, 96
        %v986 = vpop.permute.xlu0 %985
        %vm987 = vcmask 130048
        %v989 = vsel %vm987, %v983, 0
        %v992 = vsel %vm987, %v986, 0
        %994 = vmatprep.subr.bf16.mxu0 0
        %995 = vmatpush1.bf16.xpose.msra.mxu0 %v992
        %996 = vmatprep.subr.bf16.mxu0 0
        %997 = vmatpush1.bf16.xpose.msra.mxu0 0
        %998 = vmatprep.subr.bf16.mxu0 0
        %999 = vmatpush1.bf16.xpose.msra.mxu0 0
        %1000 = vmatprep.subr.bf16.mxu0 0
        %1001 = vmatpush1.bf16.xpose.msra.mxu0 0
        %1002 = vmatprep.subr.bf16.mxu0 0
        %1003 = vmatpush1.bf16.xpose.msra.mxu0 0
        %1004 = vmatprep.subr.bf16.mxu0 0
        %1005 = vmatpush1.bf16.xpose.msra.mxu0 0
        %1006 = vmatprep.subr.bf16.mxu0 0
        %1007 = vmatpush1.bf16.xpose.msra.mxu0 0
        %1008 = vmatprep.subr.bf16.mxu0 0
        %1009 = vmatpush1.bf16.xpose.msra.mxu0 0
        %1010 = vmatprep.subr.bf16.mxu0 0
        %1011 = vmatpush1.bf16.xpose.msra.mxu0 0
        %1012 = vmatprep.subr.bf16.mxu0 0
        %1013 = vmatpush1.bf16.xpose.msra.mxu0 0
        %1014 = vmatprep.subr.bf16.mxu0 0
        %1015 = vmatpush1.bf16.xpose.msra.mxu0 0
        %1016 = vmatprep.subr.bf16.mxu0 0
        %1017 = vmatpush1.bf16.xpose.msra.mxu0 0
        %1018 = vmatprep.subr.bf16.mxu0 0
        %1019 = vmatpush1.bf16.xpose.msra.mxu0 0
        %1020 = vmatprep.subr.bf16.mxu0 0
        %1021 = vmatpush1.bf16.xpose.msra.mxu0 0
        %1022 = vmatprep.subr.bf16.mxu0 0
        %1023 = vmatpush1.bf16.xpose.msra.mxu0 0
        %1024 = vmatprep.subr.bf16.mxu0 0
        %1025 = vmatpush1.bf16.xpose.msra.mxu0 0
        %1026 = vmatprep.mubr.bf16.mxu0 0
        %1027 = vmatmul.mubr.bf16.gmra.mrb[0].mxu0 %v989
        %v1028 = vpop.f32.mrb[0].mxu0
        %v1029 = vadd.f32 0.0, %v1028
        %v1030 = vpop.f32.mrb[0].mxu0
        %v1031 = vpop.f32.mrb[0].mxu0
        %v1032 = vadd.f32 0.0, %v1031
        %v1033 = vpop.f32.mrb[0].mxu0
        %1034 = vdwg.mxu0
        %v1035 = vmul.f32 %v1029, 0.25
        %v1036 = vmul.f32 %v1032, 0.25
        %v1037 = vadd.f32 %v1035, %v922
        %v1038 = vadd.f32 %v1036, %v923
        %v1039 = vsel %vm987, %v1037, -inf
        %1040 = vmax.xlane.f32.xlu0 %v1039
        %v1041 = vpop.xlane.xlu0 %1040
        %v1042 = vsel %vm987, %v1038, -inf
        %1043 = vmax.xlane.f32.xlu0 %v1042
        %v1044 = vpop.xlane.xlu0 %1043
        %v1045 = vsub.f32 %v1037, %v1041
        %v1046 = vsub.f32 %v1038, %v1044
        %v1047 = vmul.f32 %v1045, 1.442695
        %v1048 = vpow.pop %v1047
        %v1049 = vmul.f32 %v1046, 1.442695
        %v1050 = vpow.pop %v1049
        %v1051 = vsel %vm987, %v1048, 0.0
        %1052 = vadd.xlane.f32.xlu0 %v1051
        %v1053 = vpop.xlane.xlu0 %1052
        %v1054 = vsel %vm987, %v1050, 0.0
        %1055 = vadd.xlane.f32.xlu0 %v1054
        %v1056 = vpop.xlane.xlu0 %1055
        %v1057 = vrcp.pop %v1053
        %v1058 = vmul.f32 %v1048, %v1057
        %v1059 = vrcp.pop %v1056
        %v1060 = vmul.f32 %v1050, %v1059
        %v1061 = vpack.c.bf16 %v1060, %v1058
        %1062 = vrot.lane.b32.xlu0 %v983, 64
        %v1063 = vpop.permute.xlu0 %1062
        %v1066 = vsel %vm987, %v1061, 0
        %1068 = vmatprep.subr.bf16.mxu0 0
        %1069 = vmatpush1.bf16.msra.mxu0 %v1063
        %1070 = vmatprep.subr.bf16.mxu0 0
        %1071 = vmatpush1.bf16.msra.mxu0 0
        %1072 = vmatprep.subr.bf16.mxu0 0
        %1073 = vmatpush1.bf16.msra.mxu0 0
        %1074 = vmatprep.subr.bf16.mxu0 0
        %1075 = vmatpush1.bf16.msra.mxu0 0
        %1076 = vmatprep.subr.bf16.mxu0 0
        %1077 = vmatpush1.bf16.msra.mxu0 0
        %1078 = vmatprep.subr.bf16.mxu0 0
        %1079 = vmatpush1.bf16.msra.mxu0 0
        %1080 = vmatprep.subr.bf16.mxu0 0
        %1081 = vmatpush1.bf16.msra.mxu0 0
        %1082 = vmatprep.subr.bf16.mxu0 0
        %1083 = vmatpush1.bf16.msra.mxu0 0
        %1084 = vmatprep.subr.bf16.mxu0 0
        %1085 = vmatpush1.bf16.msra.mxu0 0
        %1086 = vmatprep.subr.bf16.mxu0 0
        %1087 = vmatpush1.bf16.msra.mxu0 0
        %1088 = vmatprep.subr.bf16.mxu0 0
        %1089 = vmatpush1.bf16.msra.mxu0 0
        %1090 = vmatprep.subr.bf16.mxu0 0
        %1091 = vmatpush1.bf16.msra.mxu0 0
        %1092 = vmatprep.subr.bf16.mxu0 0
        %1093 = vmatpush1.bf16.msra.mxu0 0
        %1094 = vmatprep.subr.bf16.mxu0 0
        %1095 = vmatpush1.bf16.msra.mxu0 0
        %1096 = vmatprep.subr.bf16.mxu0 0
        %1097 = vmatpush1.bf16.msra.mxu0 0
        %1098 = vmatprep.subr.bf16.mxu0 0
        %1099 = vmatpush1.bf16.msra.mxu0 0
        %1100 = vmatprep.mubr.bf16.mxu0 0
        %1101 = vmatmul.mubr.bf16.gmra.mrb[0].mxu0 %v1066
        %v1102 = vpop.f32.mrb[0].mxu0
        %v1103 = vadd.f32 0.0, %v1102
        %v1104 = vpop.f32.mrb[0].mxu0
        %v1105 = vpop.f32.mrb[0].mxu0
        %v1106 = vadd.f32 0.0, %v1105
        %v1107 = vpop.f32.mrb[0].mxu0
        %1108 = vdwg.mxu0
        %1109 = vst.msk [vmem:[#allocation3] sm:$0xff] %vm987, %v1103
        %1110 = vst.msk [vmem:[#allocation3 + $0x8] sm:$0xff] %vm987, %v1106
        %1111 = vrot.lane.b32.xlu0 %v983, 112
        %v1112 = vpop.permute.xlu0 %1111
        %1113 = vrot.lane.b32.xlu0 %v983, 80
        %v1114 = vpop.permute.xlu0 %1113
        %v1116 = vsel %vm987, %v1112, 0
        %v1119 = vsel %vm987, %v1114, 0
        %1121 = vmatprep.subr.bf16.mxu0 0
        %1122 = vmatpush1.bf16.xpose.msra.mxu0 %v1119
        %1123 = vmatprep.subr.bf16.mxu0 0
        %1124 = vmatpush1.bf16.xpose.msra.mxu0 0
        %1125 = vmatprep.subr.bf16.mxu0 0
        %1126 = vmatpush1.bf16.xpose.msra.mxu0 0
        %1127 = vmatprep.subr.bf16.mxu0 0
        %1128 = vmatpush1.bf16.xpose.msra.mxu0 0
        %1129 = vmatprep.subr.bf16.mxu0 0
        %1130 = vmatpush1.bf16.xpose.msra.mxu0 0
        %1131 = vmatprep.subr.bf16.mxu0 0
        %1132 = vmatpush1.bf16.xpose.msra.mxu0 0
        %1133 = vmatprep.subr.bf16.mxu0 0
        %1134 = vmatpush1.bf16.xpose.msra.mxu0 0
        %1135 = vmatprep.subr.bf16.mxu0 0
        %1136 = vmatpush1.bf16.xpose.msra.mxu0 0
        %1137 = vmatprep.subr.bf16.mxu0 0
        %1138 = vmatpush1.bf16.xpose.msra.mxu0 0
        %1139 = vmatprep.subr.bf16.mxu0 0
        %1140 = vmatpush1.bf16.xpose.msra.mxu0 0
        %1141 = vmatprep.subr.bf16.mxu0 0
        %1142 = vmatpush1.bf16.xpose.msra.mxu0 0
        %1143 = vmatprep.subr.bf16.mxu0 0
        %1144 = vmatpush1.bf16.xpose.msra.mxu0 0
        %1145 = vmatprep.subr.bf16.mxu0 0
        %1146 = vmatpush1.bf16.xpose.msra.mxu0 0
        %1147 = vmatprep.subr.bf16.mxu0 0
        %1148 = vmatpush1.bf16.xpose.msra.mxu0 0
        %1149 = vmatprep.subr.bf16.mxu0 0
        %1150 = vmatpush1.bf16.xpose.msra.mxu0 0
        %1151 = vmatprep.subr.bf16.mxu0 0
        %1152 = vmatpush1.bf16.xpose.msra.mxu0 0
        %1153 = vmatprep.mubr.bf16.mxu0 0
        %1154 = vmatmul.mubr.bf16.gmra.mrb[0].mxu0 %v1116
        %v1155 = vpop.f32.mrb[0].mxu0
        %v1156 = vadd.f32 0.0, %v1155
        %v1157 = vpop.f32.mrb[0].mxu0
        %v1158 = vpop.f32.mrb[0].mxu0
        %v1159 = vadd.f32 0.0, %v1158
        %v1160 = vpop.f32.mrb[0].mxu0
        %1161 = vdwg.mxu0
        %v1162 = vmul.f32 %v1156, 0.25
        %v1163 = vmul.f32 %v1159, 0.25
        %v1164 = vadd.f32 %v1162, %v922
        %v1165 = vadd.f32 %v1163, %v923
        %v1166 = vsel %vm987, %v1164, -inf
        %1167 = vmax.xlane.f32.xlu0 %v1166
        %v1168 = vpop.xlane.xlu0 %1167
        %v1169 = vsel %vm987, %v1165, -inf
        %1170 = vmax.xlane.f32.xlu0 %v1169
        %v1171 = vpop.xlane.xlu0 %1170
        %v1172 = vsub.f32 %v1164, %v1168
        %v1173 = vsub.f32 %v1165, %v1171
        %v1174 = vmul.f32 %v1172, 1.442695
        %v1175 = vpow.pop %v1174
        %v1176 = vmul.f32 %v1173, 1.442695
        %v1177 = vpow.pop %v1176
        %v1178 = vsel %vm987, %v1175, 0.0
        %1179 = vadd.xlane.f32.xlu0 %v1178
        %v1180 = vpop.xlane.xlu0 %1179
        %v1181 = vsel %vm987, %v1177, 0.0
        %1182 = vadd.xlane.f32.xlu0 %v1181
        %v1183 = vpop.xlane.xlu0 %1182
        %v1184 = vrcp.pop %v1180
        %v1185 = vmul.f32 %v1175, %v1184
        %v1186 = vrcp.pop %v1183
        %v1187 = vmul.f32 %v1177, %v1186
        %v1188 = vpack.c.bf16 %v1187, %v1185
        %1189 = vrot.lane.b32.xlu0 %v983, 48
        %v1190 = vpop.permute.xlu0 %1189
        %v1193 = vsel %vm987, %v1188, 0
        %1195 = vmatprep.subr.bf16.mxu0 0
        %1196 = vmatpush1.bf16.msra.mxu0 %v1190
        %1197 = vmatprep.subr.bf16.mxu0 0
        %1198 = vmatpush1.bf16.msra.mxu0 0
        %1199 = vmatprep.subr.bf16.mxu0 0
        %1200 = vmatpush1.bf16.msra.mxu0 0
        %1201 = vmatprep.subr.bf16.mxu0 0
        %1202 = vmatpush1.bf16.msra.mxu0 0
        %1203 = vmatprep.subr.bf16.mxu0 0
        %1204 = vmatpush1.bf16.msra.mxu0 0
        %1205 = vmatprep.subr.bf16.mxu0 0
        %1206 = vmatpush1.bf16.msra.mxu0 0
        %1207 = vmatprep.subr.bf16.mxu0 0
        %1208 = vmatpush1.bf16.msra.mxu0 0
        %1209 = vmatprep.subr.bf16.mxu0 0
        %1210 = vmatpush1.bf16.msra.mxu0 0
        %1211 = vmatprep.subr.bf16.mxu0 0
        %1212 = vmatpush1.bf16.msra.mxu0 0
        %1213 = vmatprep.subr.bf16.mxu0 0
        %1214 = vmatpush1.bf16.msra.mxu0 0
        %1215 = vmatprep.subr.bf16.mxu0 0
        %1216 = vmatpush1.bf16.msra.mxu0 0
        %1217 = vmatprep.subr.bf16.mxu0 0
        %1218 = vmatpush1.bf16.msra.mxu0 0
        %1219 = vmatprep.subr.bf16.mxu0 0
        %1220 = vmatpush1.bf16.msra.mxu0 0
        %1221 = vmatprep.subr.bf16.mxu0 0
        %1222 = vmatpush1.bf16.msra.mxu0 0
        %1223 = vmatprep.subr.bf16.mxu0 0
        %1224 = vmatpush1.bf16.msra.mxu0 0
        %1225 = vmatprep.subr.bf16.mxu0 0
        %1226 = vmatpush1.bf16.msra.mxu0 0
        %1227 = vmatprep.mubr.bf16.mxu0 0
        %1228 = vmatmul.mubr.bf16.gmra.mrb[0].mxu0 %v1193
        %v1229 = vpop.f32.mrb[0].mxu0
        %v1230 = vadd.f32 0.0, %v1229
        %v1231 = vpop.f32.mrb[0].mxu0
        %v1232 = vpop.f32.mrb[0].mxu0
        %v1233 = vadd.f32 0.0, %v1232
        %v1234 = vpop.f32.mrb[0].mxu0
        %1235 = vdwg.mxu0
        %1238 = vrot.lane.b32.xlu0 %v1230, 16
        %v1239 = vpop.permute.xlu0 %1238
        %1240 = vrot.lane.b32.xlu0 %v1233, 16
        %v1241 = vpop.permute.xlu0 %1240
        %vm1244 = vcmask 261248
        %1245 = vst.msk [vmem:[#allocation3] sm:$0xff] %vm1244, %v1239
        %1246 = vst.msk [vmem:[#allocation3 + $0x8] sm:$0xff] %vm1244, %v1241
        %v1247 = vld [vmem:[#allocation3] sm:$0xff]
        %v1248 = vld [vmem:[#allocation3 + $0x8] sm:$0xff]
        %v1249 = vpack.c.bf16 %v1248, %v1247
        %v1250 = vld [vmem:[%s839] sm:$0xff]
        %v1251 = vld [vmem:[%s839 + $0x8] sm:$0xff]
        %v1252 = vld [vmem:[%s839 + $0x10] sm:$0xff]
        %v1253 = vld [vmem:[%s839 + $0x18] sm:$0xff]
        %v1254 = vpack.c.bf16 %v1251, %v1250
        %v1255 = vpack.c.bf16 %v1253, %v1252
        %v1256 = vld [vmem:[%s842] sm:$0x1]
        %v1258 = vlaneseq
        %v1259 = vshrl.u32 %v1258, 7
        %v1260 = vsub.s32 0, %v1259
        %v1261 = vrot.slane %v1256, %v1260
        %v1264 = vsel %vm938, %v1249, 0
        %1266 = vmatprep.subr.bf16.mxu0 0
        %1267 = vmatpush1.bf16.msra.mxu0 %v1254
        %1268 = vmatprep.subr.bf16.mxu0 0
        %1269 = vmatpush1.bf16.msra.mxu0 %v1255
        %1270 = vmatprep.subr.bf16.mxu0 0
        %1271 = vmatpush1.bf16.msra.mxu0 0
        %1272 = vmatprep.subr.bf16.mxu0 0
        %1273 = vmatpush1.bf16.msra.mxu0 0
        %1274 = vmatprep.subr.bf16.mxu0 0
        %1275 = vmatpush1.bf16.msra.mxu0 0
        %1276 = vmatprep.subr.bf16.mxu0 0
        %1277 = vmatpush1.bf16.msra.mxu0 0
        %1278 = vmatprep.subr.bf16.mxu0 0
        %1279 = vmatpush1.bf16.msra.mxu0 0
        %1280 = vmatprep.subr.bf16.mxu0 0
        %1281 = vmatpush1.bf16.msra.mxu0 0
        %1282 = vmatprep.subr.bf16.mxu0 0
        %1283 = vmatpush1.bf16.msra.mxu0 0
        %1284 = vmatprep.subr.bf16.mxu0 0
        %1285 = vmatpush1.bf16.msra.mxu0 0
        %1286 = vmatprep.subr.bf16.mxu0 0
        %1287 = vmatpush1.bf16.msra.mxu0 0
        %1288 = vmatprep.subr.bf16.mxu0 0
        %1289 = vmatpush1.bf16.msra.mxu0 0
        %1290 = vmatprep.subr.bf16.mxu0 0
        %1291 = vmatpush1.bf16.msra.mxu0 0
        %1292 = vmatprep.subr.bf16.mxu0 0
        %1293 = vmatpush1.bf16.msra.mxu0 0
        %1294 = vmatprep.subr.bf16.mxu0 0
        %1295 = vmatpush1.bf16.msra.mxu0 0
        %1296 = vmatprep.subr.bf16.mxu0 0
        %1297 = vmatpush1.bf16.msra.mxu0 0
        %1298 = vmatprep.mubr.bf16.mxu0 0
        %1299 = vmatmul.mubr.bf16.gmra.mrb[0].mxu0 %v1264
        %v1300 = vpop.f32.mrb[0].mxu0
        %v1301 = vadd.f32 %v1261, %v1300
        %v1302 = vpop.f32.mrb[0].mxu0
        %v1303 = vpop.f32.mrb[0].mxu0
        %v1304 = vadd.f32 %v1261, %v1303
        %v1305 = vpop.f32.mrb[0].mxu0
        %1306 = vdwg.mxu0
        %v1307 = vadd.f32 %v1301, %v920
        %v1308 = vadd.f32 %v1304, %v921
        %v1309 = vld [vmem:[%s845] sm:$0x1]
        %v1310 = vld [vmem:[%s726] sm:$0x1]
        %v1311 = vsel %vm938, %v1307, 0.0
        %1312 = vadd.xlane.f32.xlu0 %v1311
        %v1313 = vpop.xlane.xlu0 %1312
        %v1314 = vsel %vm938, %v1308, 0.0
        %1315 = vadd.xlane.f32.xlu0 %v1314
        %v1316 = vpop.xlane.xlu0 %1315
        %v1317 = vrcp.pop 32.0
        %v1318 = vmul.f32 %v1313, %v1317
        %v1319 = vmul.f32 %v1316, %v1317
        %v1320 = vsub.f32 %v1307, %v1318
        %v1321 = vsub.f32 %v1308, %v1319
        %v1322 = vmul.f32 %v1320, %v1320
        %v1323 = vmul.f32 %v1321, %v1321
        %v1324 = vsel %vm938, %v1322, 0.0
        %1325 = vadd.xlane.f32.xlu0 %v1324
        %v1326 = vpop.xlane.xlu0 %1325
        %v1327 = vsel %vm938, %v1323, 0.0
        %1328 = vadd.xlane.f32.xlu0 %v1327
        %v1329 = vpop.xlane.xlu0 %1328
        %v1330 = vmul.f32 %v1326, %v1317
        %v1331 = vmul.f32 %v1329, %v1317
        %v1332 = vadd.f32 %v1330, 1e-12
        %v1333 = vadd.f32 %v1331, 1e-12
        %v1334 = vrsqrt.pop %v1332
        %v1335 = vrsqrt.pop %v1333
        %v1336 = vmul.f32 %v1320, %v1334
        %v1337 = vmul.f32 %v1321, %v1335
        %v1339 = vlaneseq
        %v1340 = vshrl.u32 %v1339, 7
        %v1341 = vsub.s32 0, %v1340
        %v1342 = vrot.slane %v1309, %v1341
        %v1344 = vmul.f32 %v1336, %v1342
        %v1345 = vmul.f32 %v1337, %v1342
        %v1347 = vlaneseq
        %v1348 = vshrl.u32 %v1347, 7
        %v1349 = vsub.s32 0, %v1348
        %v1350 = vrot.slane %v1310, %v1349
        %v1352 = vadd.f32 %v1344, %v1350
        %v1353 = vadd.f32 %v1345, %v1350
        %v1354 = vpack.c.bf16 %v1353, %v1352
        %v1355 = vld [vmem:[%s850] sm:$0xff]
        %v1356 = vld [vmem:[%s850 + $0x8] sm:$0xff]
        %v1357 = vld [vmem:[%s850 + $0x10] sm:$0xff]
        %v1358 = vld [vmem:[%s850 + $0x18] sm:$0xff]
        %v1359 = vpack.c.bf16 %v1356, %v1355
        %v1360 = vpack.c.bf16 %v1358, %v1357
        %v1361 = vld [vmem:[%s734] sm:$0x1]
        %v1363 = vlaneseq
        %v1364 = vshrl.u32 %v1363, 7
        %v1365 = vsub.s32 0, %v1364
        %v1366 = vrot.slane %v1361, %v1365
        %v1369 = vsel %vm938, %v1354, 0
        %1371 = vmatprep.subr.bf16.mxu0 0
        %1372 = vmatpush1.bf16.msra.mxu0 %v1359
        %1373 = vmatprep.subr.bf16.mxu0 0
        %1374 = vmatpush1.bf16.msra.mxu0 %v1360
        %1375 = vmatprep.subr.bf16.mxu0 0
        %1376 = vmatpush1.bf16.msra.mxu0 0
        %1377 = vmatprep.subr.bf16.mxu0 0
        %1378 = vmatpush1.bf16.msra.mxu0 0
        %1379 = vmatprep.subr.bf16.mxu0 0
        %1380 = vmatpush1.bf16.msra.mxu0 0
        %1381 = vmatprep.subr.bf16.mxu0 0
        %1382 = vmatpush1.bf16.msra.mxu0 0
        %1383 = vmatprep.subr.bf16.mxu0 0
        %1384 = vmatpush1.bf16.msra.mxu0 0
        %1385 = vmatprep.subr.bf16.mxu0 0
        %1386 = vmatpush1.bf16.msra.mxu0 0
        %1387 = vmatprep.subr.bf16.mxu0 0
        %1388 = vmatpush1.bf16.msra.mxu0 0
        %1389 = vmatprep.subr.bf16.mxu0 0
        %1390 = vmatpush1.bf16.msra.mxu0 0
        %1391 = vmatprep.subr.bf16.mxu0 0
        %1392 = vmatpush1.bf16.msra.mxu0 0
        %1393 = vmatprep.subr.bf16.mxu0 0
        %1394 = vmatpush1.bf16.msra.mxu0 0
        %1395 = vmatprep.subr.bf16.mxu0 0
        %1396 = vmatpush1.bf16.msra.mxu0 0
        %1397 = vmatprep.subr.bf16.mxu0 0
        %1398 = vmatpush1.bf16.msra.mxu0 0
        %1399 = vmatprep.subr.bf16.mxu0 0
        %1400 = vmatpush1.bf16.msra.mxu0 0
        %1401 = vmatprep.subr.bf16.mxu0 0
        %1402 = vmatpush1.bf16.msra.mxu0 0
        %1403 = vmatprep.mubr.bf16.mxu0 0
        %1404 = vmatmul.mubr.bf16.gmra.mrb[0].mxu0 %v1369
        %v1405 = vpop.f32.mrb[0].mxu0
        %v1406 = vadd.f32 %v1366, %v1405
        %v1407 = vpop.f32.mrb[0].mxu0
        %v1408 = vpop.f32.mrb[0].mxu0
        %v1409 = vadd.f32 %v1366, %v1408
        %v1410 = vpop.f32.mrb[0].mxu0
        %1411 = vdwg.mxu0
        %v1412 = vmul.f32 %v1406, %v1406
        %v1413 = vmul.f32 %v1409, %v1409
        %v1414 = vmul.f32 %v1406, %v1412
        %v1415 = vmul.f32 %v1409, %v1413
        %v1416 = vmul.f32 %v1414, 0.044715
        %v1417 = vmul.f32 %v1415, 0.044715
        %v1418 = vadd.f32 %v1406, %v1416
        %v1419 = vadd.f32 %v1409, %v1417
        %v1420 = vmul.f32 %v1418, 0.7978846
        %v1421 = vmul.f32 %v1419, 0.7978846
        %v1422 = vtanh.pop %v1420
        %v1423 = vtanh.pop %v1421
        %v1424 = vadd.f32 %v1422, 1.0
        %v1425 = vadd.f32 %v1423, 1.0
        %v1426 = vmul.f32 %v1424, 0.5
        %v1427 = vmul.f32 %v1425, 0.5
        %v1428 = vmul.f32 %v1406, %v1426
        %v1429 = vmul.f32 %v1409, %v1427
        %v1430 = vpack.c.bf16 %v1429, %v1428
        %v1431 = vld [vmem:[%s855] sm:$0xff]
        %v1432 = vld [vmem:[%s855 + $0x8] sm:$0xff]
        %v1433 = vld [vmem:[%s855 + $0x10] sm:$0xff]
        %v1434 = vld [vmem:[%s855 + $0x18] sm:$0xff]
        %v1435 = vld [vmem:[%s855 + $0x20] sm:$0xff]
        %v1436 = vld [vmem:[%s855 + $0x28] sm:$0xff]
        %v1437 = vld [vmem:[%s855 + $0x30] sm:$0xff]
        %v1438 = vld [vmem:[%s855 + $0x38] sm:$0xff]
        %v1439 = vpack.c.bf16 %v1432, %v1431
        %v1440 = vpack.c.bf16 %v1434, %v1433
        %v1441 = vpack.c.bf16 %v1436, %v1435
        %v1442 = vpack.c.bf16 %v1438, %v1437
        %v1443 = vld [vmem:[%s858] sm:$0x1]
        %v1445 = vlaneseq
        %v1446 = vshrl.u32 %v1445, 7
        %v1447 = vsub.s32 0, %v1446
        %v1448 = vrot.slane %v1443, %v1447
        %vm1450 = vcmask 523264
        %v1452 = vsel %vm1450, %v1430, 0
        %1454 = vmatprep.subr.bf16.mxu0 0
        %1455 = vmatpush1.bf16.msra.mxu0 %v1439
        %1456 = vmatprep.subr.bf16.mxu0 0
        %1457 = vmatpush1.bf16.msra.mxu0 %v1440
        %1458 = vmatprep.subr.bf16.mxu0 0
        %1459 = vmatpush1.bf16.msra.mxu0 %v1441
        %1460 = vmatprep.subr.bf16.mxu0 0
        %1461 = vmatpush1.bf16.msra.mxu0 %v1442
        %1462 = vmatprep.subr.bf16.mxu0 0
        %1463 = vmatpush1.bf16.msra.mxu0 0
        %1464 = vmatprep.subr.bf16.mxu0 0
        %1465 = vmatpush1.bf16.msra.mxu0 0
        %1466 = vmatprep.subr.bf16.mxu0 0
        %1467 = vmatpush1.bf16.msra.mxu0 0
        %1468 = vmatprep.subr.bf16.mxu0 0
        %1469 = vmatpush1.bf16.msra.mxu0 0
        %1470 = vmatprep.subr.bf16.mxu0 0
        %1471 = vmatpush1.bf16.msra.mxu0 0
        %1472 = vmatprep.subr.bf16.mxu0 0
        %1473 = vmatpush1.bf16.msra.mxu0 0
        %1474 = vmatprep.subr.bf16.mxu0 0
        %1475 = vmatpush1.bf16.msra.mxu0 0
        %1476 = vmatprep.subr.bf16.mxu0 0
        %1477 = vmatpush1.bf16.msra.mxu0 0
        %1478 = vmatprep.subr.bf16.mxu0 0
        %1479 = vmatpush1.bf16.msra.mxu0 0
        %1480 = vmatprep.subr.bf16.mxu0 0
        %1481 = vmatpush1.bf16.msra.mxu0 0
        %1482 = vmatprep.subr.bf16.mxu0 0
        %1483 = vmatpush1.bf16.msra.mxu0 0
        %1484 = vmatprep.subr.bf16.mxu0 0
        %1485 = vmatpush1.bf16.msra.mxu0 0
        %1486 = vmatprep.mubr.bf16.mxu0 0
        %1487 = vmatmul.mubr.bf16.gmra.mrb[0].mxu0 %v1452
        %v1488 = vpop.f32.mrb[0].mxu0
        %v1489 = vadd.f32 %v1448, %v1488
        %v1490 = vpop.f32.mrb[0].mxu0
        %v1491 = vpop.f32.mrb[0].mxu0
        %v1492 = vadd.f32 %v1448, %v1491
        %v1493 = vpop.f32.mrb[0].mxu0
        %1494 = vdwg.mxu0
        %v1495 = vadd.f32 %v1489, %v1352
        %v1496 = vadd.f32 %v1492, %v1353
        %v1497 = vld [vmem:[%s861] sm:$0x1]
        %v1498 = vld [vmem:[%s864] sm:$0x1]
        %v1499 = vsel %vm938, %v1495, 0.0
        %1500 = vadd.xlane.f32.xlu0 %v1499
        %v1501 = vpop.xlane.xlu0 %1500
        %v1502 = vsel %vm938, %v1496, 0.0
        %1503 = vadd.xlane.f32.xlu0 %v1502
        %v1504 = vpop.xlane.xlu0 %1503
        %v1505 = vmul.f32 %v1501, %v1317
        %v1506 = vmul.f32 %v1504, %v1317
        %v1507 = vsub.f32 %v1495, %v1505
        %v1508 = vsub.f32 %v1496, %v1506
        %v1509 = vmul.f32 %v1507, %v1507
        %v1510 = vmul.f32 %v1508, %v1508
        %v1511 = vsel %vm938, %v1509, 0.0
        %1512 = vadd.xlane.f32.xlu0 %v1511
        %v1513 = vpop.xlane.xlu0 %1512
        %v1514 = vsel %vm938, %v1510, 0.0
        %1515 = vadd.xlane.f32.xlu0 %v1514
        %v1516 = vpop.xlane.xlu0 %1515
        %v1517 = vmul.f32 %v1513, %v1317
        %v1518 = vmul.f32 %v1516, %v1317
        %v1519 = vadd.f32 %v1517, 1e-12
        %v1520 = vadd.f32 %v1518, 1e-12
        %v1521 = vrsqrt.pop %v1519
        %v1522 = vrsqrt.pop %v1520
        %v1523 = vmul.f32 %v1507, %v1521
        %v1524 = vmul.f32 %v1508, %v1522
        %v1526 = vlaneseq
        %v1527 = vshrl.u32 %v1526, 7
        %v1528 = vsub.s32 0, %v1527
        %v1529 = vrot.slane %v1497, %v1528
        %v1531 = vmul.f32 %v1523, %v1529
        %v1532 = vmul.f32 %v1524, %v1529
        %v1534 = vlaneseq
        %v1535 = vshrl.u32 %v1534, 7
        %v1536 = vsub.s32 0, %v1535
        %v1537 = vrot.slane %v1498, %v1536
        %v1539 = vadd.f32 %v1531, %v1537
        %v1540 = vadd.f32 %v1532, %v1537
        %1541 = vst.msk [vmem:[#allocation2] sm:$0xff] %vm938, %v1539
        %1542 = vst.msk [vmem:[#allocation2 + $0x8] sm:$0xff] %vm938, %v1540
        %p1543 = scmp.eq.s32.totalorder %s40, 1
        // Predicated region
        $region121: #{tpu_custom_call.1} parent=95 // pred_check
          %p1544 = pneg %p1543
        $region122: #{tpu_custom_call.1} parent=95 // pred_check_branch
          %1546 = sbr.rel (%p1544) target = $region124
        $region123: #{tpu_custom_call.1} parent=95 // pred_region
          %v1547 = vld [vmem:[#allocation2] ss:$8 sm:$0x3]
          %v1548 = vpack.c.bf16 %v1547, %v1547
          %v1549 = vld [vmem:[%s16] sm:$0xff]
          %v1550 = vld [vmem:[%s16 + $0x8] sm:$0xff]
          %v1551 = vld [vmem:[%s16 + $0x10] sm:$0xff]
          %v1552 = vld [vmem:[%s16 + $0x18] sm:$0xff]
          %v1553 = vpack.c.bf16 %v1550, %v1549
          %v1554 = vpack.c.bf16 %v1552, %v1551
          %v1555 = vld [vmem:[#allocation4] sm:$0x1]
          %v1557 = vlaneseq
          %v1558 = vshrl.u32 %v1557, 7
          %v1559 = vsub.s32 0, %v1558
          %v1560 = vrot.slane %v1555, %v1559
          %v1563 = vsel %vm938, %v1548, 0
          %1565 = vmatprep.subr.bf16.mxu0 0
          %1566 = vmatpush1.bf16.msra.mxu0 %v1553
          %1567 = vmatprep.subr.bf16.mxu0 0
          %1568 = vmatpush1.bf16.msra.mxu0 %v1554
          %1569 = vmatprep.subr.bf16.mxu0 0
          %1570 = vmatpush1.bf16.msra.mxu0 0
          %1571 = vmatprep.subr.bf16.mxu0 0
          %1572 = vmatpush1.bf16.msra.mxu0 0
          %1573 = vmatprep.subr.bf16.mxu0 0
          %1574 = vmatpush1.bf16.msra.mxu0 0
          %1575 = vmatprep.subr.bf16.mxu0 0
          %1576 = vmatpush1.bf16.msra.mxu0 0
          %1577 = vmatprep.subr.bf16.mxu0 0
          %1578 = vmatpush1.bf16.msra.mxu0 0
          %1579 = vmatprep.subr.bf16.mxu0 0
          %1580 = vmatpush1.bf16.msra.mxu0 0
          %1581 = vmatprep.subr.bf16.mxu0 0
          %1582 = vmatpush1.bf16.msra.mxu0 0
          %1583 = vmatprep.subr.bf16.mxu0 0
          %1584 = vmatpush1.bf16.msra.mxu0 0
          %1585 = vmatprep.subr.bf16.mxu0 0
          %1586 = vmatpush1.bf16.msra.mxu0 0
          %1587 = vmatprep.subr.bf16.mxu0 0
          %1588 = vmatpush1.bf16.msra.mxu0 0
          %1589 = vmatprep.subr.bf16.mxu0 0
          %1590 = vmatpush1.bf16.msra.mxu0 0
          %1591 = vmatprep.subr.bf16.mxu0 0
          %1592 = vmatpush1.bf16.msra.mxu0 0
          %1593 = vmatprep.subr.bf16.mxu0 0
          %1594 = vmatpush1.bf16.msra.mxu0 0
          %1595 = vmatprep.subr.bf16.mxu0 0
          %1596 = vmatpush1.bf16.msra.mxu0 0
          %1597 = vmatprep.mubr.bf16.mxu0 0
          %1598 = vmatmul.mubr.bf16.gmra.mrb[0].mxu0 %v1563
          %v1599 = vpop.f32.mrb[0].mxu0
          %v1600 = vadd.f32 %v1560, %v1599
          %v1601 = vpop.f32.mrb[0].mxu0
          %v1602 = vpop.f32.mrb[0].mxu0
          %v1603 = vpop.f32.mrb[0].mxu0
          %1604 = vdwg.mxu0
          %vm1605 = vcmask 1024
          %1606 = vst.msk [vmem:[%s19] sm:$0x3] %vm1605, %v1600
          %v1607 = vld [vmem:[%s18] sm:$0x3]
          %v1608 = vsub.f32 %v1600, %v1607
          %v1609 = vmul.f32 %v1608, %v1608
          %v1610 = vsel %vm1605, %v1609, 0.0
          %v1611 = vrot.slane %v1610, 4
          %v1612 = vadd.f32 %v1610, %v1611
          %v1613 = vrot.slane %v1612, 2
          %v1614 = vadd.f32 %v1612, %v1613
          %v1615 = vrot.slane %v1614, 1
          %v1616 = vadd.f32 %v1614, %v1615
          %v1617 = vmul.f32 %v1616, 0.5
          %vm1618 = vcmask 0
          %1619 = vst.msk [vmem:[#allocation14] sm:$0x1] %vm1618, %v1617
        $region124: #{tpu_custom_call.1} parent=95 // pred_fallthru
          _
        // Predicated region
        $region125: #{tpu_custom_call.1} parent=95 // pred_check
          %p1620 = pneg %p512
        $region126: #{tpu_custom_call.1} parent=95 // pred_check_branch
          %1622 = sbr.rel (%p1620) target = $region128
        $region127: #{tpu_custom_call.1} parent=95 // pred_region
          _
        $region128: #{tpu_custom_call.1} parent=95 // pred_fallthru
          _
        // Predicated region
        $region129: #{tpu_custom_call.1} parent=95 // pred_check
          %p1623 = pneg %p533
        $region130: #{tpu_custom_call.1} parent=95 // pred_check_branch
          %1625 = sbr.rel (%p1623) target = $region132
        $region131: #{tpu_custom_call.1} parent=95 // pred_region
          %s1627 = ssub.s32 16, 16
          %1628 = vsyncadd [#allocation7], %s1627
          %s1630 = sshll.u32 [#allocation14], 4
          %s1631 = int_to_ptr.vmem [resolvable:$true] %s1630
          %1633 = dma.vmem_to_hbm [thread:$0]  %s1631, 16, %s20, [#allocation7]
        $region132: #{tpu_custom_call.1} parent=95 // pred_fallthru
          _
        // Predicated region
        $region133: #{tpu_custom_call.1} parent=95 // pred_check
          %p1634 = pneg %p512
        $region134: #{tpu_custom_call.1} parent=95 // pred_check_branch
          %1636 = sbr.rel (%p1634) target = $region136
        $region135: #{tpu_custom_call.1} parent=95 // pred_region
          _
        $region136: #{tpu_custom_call.1} parent=95 // pred_fallthru
          _
        // Predicated region
        $region137: #{tpu_custom_call.1} parent=95 // pred_check
          %p1637 = pneg %p533
        $region138: #{tpu_custom_call.1} parent=95 // pred_check_branch
          %1639 = sbr.rel (%p1637) target = $region140
        $region139: #{tpu_custom_call.1} parent=95 // pred_region
          %1640 = dma.done [#allocation7], 16
        $region140: #{tpu_custom_call.1} parent=95 // pred_fallthru
          _
      $region96: #{tpu_custom_call.1} parent=5 // pred_fallthru
        _
      %p1641 = scmp.le.s32.totalorder 2, %s35
      // Predicated region
      $region141: #{tpu_custom_call.1} parent=5 // pred_check
        %p1642 = pneg %p1641
      $region142: #{tpu_custom_call.1} parent=5 // pred_check_branch
        %1644 = sbr.rel (%p1642) target = $region144
      $region143: #{tpu_custom_call.1} parent=5 // pred_region
        %s1645 = ssub.s32 %s35, 2
      $region144: #{tpu_custom_call.1} parent=5 // pred_fallthru
        _
    $region6: #{tpu_custom_call.1} parent=1 // loop_footer
      %s39 = sadd.s32 1, %s35
    $region7: #{tpu_custom_call.1} parent=1 // loop_footer_branch
      %34 = sbr.rel target = $region3
    $region8: #{tpu_custom_call.1} parent=1 // loop_exit
      _
    %1646 = vsyncpa [#allocation6], 1
    %s1647 = scalar_lea.sflag [#allocation6], 1
    %1648 = vsyncpa %s1647, 1
    %1649 = vsyncpa [#allocation9], 1
    %1650 = vsyncpa [#allocation12], 1
    %s1651 = scalar_lea.sflag [#allocation12], 1
    %1652 = vsyncpa %s1651, 1
    %1653 = vsyncpa [#allocation7], 1
    %s1654 = scalar_lea.sflag [#allocation7], 1
    %1655 = vsyncpa %s1654, 1

</llo_original>
